<compile_context>
chip_gen: v7x
topology: tpu7x:2x2x1
jax: 0.10.0
libtpu: 0.0.40
codegen_flags: <defaults>
</compile_context>

<pallas_src>
import functools

import jax
import jax.numpy as jnp
import numpy as np
from jax.experimental import pallas as pl
from jax.experimental.pallas import tpu as pltpu

_INV_SQRT2 = 0.7071067811865476


def _geglu_kernel(x_ref, wx_ref, wg_ref, bx_ref, bg_ref, o_ref, *, approximate):
    # x_ref : (tm, dim_in)   row tile (batch+seq folded), VMEM-resident across j
    # wx_ref: (dim_in, tn)   pre-transposed "value" half of the proj weight
    # wg_ref: (dim_in, tn)   pre-transposed "gate" half of the proj weight
    # bx_ref: (1, tn)        value bias (f32)
    # bg_ref: (1, tn)        gate bias  (f32)
    # o_ref : (tm, tn)
    x = x_ref[...]
    # Gate first: its erf/tanh work overlaps the second MXU push and keeps the
    # number of simultaneously live f32 temporaries lower than h+g+gelu at once.
    g = jnp.dot(x, wg_ref[...], preferred_element_type=jnp.float32)
    g = g + bg_ref[...].astype(jnp.float32)
    if approximate:
        gelu_g = jax.nn.gelu(g, approximate=True)                 # tanh -> EUP
    else:
        gelu_g = 0.5 * g * (1.0 + jax.lax.erf(g * _INV_SQRT2))    # torch default
    h = jnp.dot(x, wx_ref[...], preferred_element_type=jnp.float32)
    h = h + bx_ref[...].astype(jnp.float32)
    o_ref[...] = (h * gelu_g).astype(o_ref.dtype)


def prepare_geglu_params(w, b, *, param_dtype=None):
    """Split + pre-transpose nn.Linear(dim_in, 2*dim_out) params.

    Do this ONCE at parameter-init time (the transpose rewrites the whole
    weight in HBM; doing it per call roughly doubles weight traffic).

    w: (2*dim_out, dim_in) PyTorch layout, b: (2*dim_out,)
    Returns wx, wg: (dim_in, dim_out); bx, bg: (1, dim_out) f32.
    param_dtype=jnp.bfloat16 casts the weights for the fast MXU path.
    """
    dim_out = w.shape[0] // 2
    wx = jnp.transpose(w[:dim_out, :])
    wg = jnp.transpose(w[dim_out:, :])
    if param_dtype is not None:
        wx = wx.astype(param_dtype)
        wg = wg.astype(param_dtype)
    bx = b[:dim_out].reshape(1, dim_out).astype(jnp.float32)
    bg = b[dim_out:].reshape(1, dim_out).astype(jnp.float32)
    return wx, wg, bx, bg


def _vmem_budget_bytes():
    cap = 64 * 1024 * 1024                        # conservative fallback (v7x)
    try:
        cap = int(pltpu.get_tpu_info().vmem_capacity_bytes)
    except Exception:
        pass
    # ~75% of physical VMEM, capped: 48 MiB on v7x, 96 MiB on v5e/v6e.
    return min(cap * 3 // 4, 96 * 1024 * 1024)


def _pick_col_tile(dim_out, target):
    if dim_out <= target or dim_out % 128 != 0:
        return dim_out
    tn = max(128, (target // 128) * 128)
    while tn > 128 and dim_out % tn != 0:
        tn -= 128
    return tn if dim_out % tn == 0 else dim_out


def _choose_tiles(m, dim_in, dim_out, x_itemsize, w_itemsize, budget,
                  block_rows, block_cols):
    tn = _pick_col_tile(dim_out, block_cols)
    tm = m if m <= block_rows else max(8, (block_rows // 8) * 8)

    def vmem_need(tm_, tn_):
        x_tile = tm_ * dim_in * x_itemsize
        o_tile = tm_ * tn_ * x_itemsize
        w_tile = 2 * dim_in * tn_ * w_itemsize + 2 * tn_ * 4
        temps = 3 * tm_ * tn_ * 4                 # g / gelu / h f32 temporaries
        return 2 * (x_tile + o_tile + w_tile) + temps   # 2x: double buffering

    # Weight slabs dominate for large dim_in: shrink the N tile first, then rows.
    while (tn > 128 and (tn // 2) % 128 == 0 and dim_out % (tn // 2) == 0
           and vmem_need(tm, tn) > budget):
        tn //= 2
    while tm > 8 and vmem_need(tm, tn) > budget:
        tm = max(8, ((tm // 2) // 8) * 8)
    return tm, tn


def _block_spec(shape, index_map, *, single_buffer=False):
    if single_buffer and hasattr(pl, "Buffered"):
        try:
            return pl.BlockSpec(shape, index_map, pipeline_mode=pl.Buffered(1))
        except TypeError:
            pass
    return pl.BlockSpec(shape, index_map)


def geglu_pallas(x, wx, wg, bx, bg, *, block_rows=512, block_cols=1024,
                 approximate=False):
    """GEGLU forward.

    x: (..., dim_in); wx/wg: (dim_in, dim_out) from prepare_geglu_params;
    bx/bg: (1, dim_out) f32.  Returns (..., dim_out) in x.dtype.
    """
    orig_shape = x.shape
    dim_in = orig_shape[-1]
    dim_out = wx.shape[1]
    out_dtype = x.dtype

    m = int(np.prod(orig_shape[:-1]))
    x2 = x.reshape(m, dim_in)

    # bf16 weights -> run both MXU operands in bf16 (accumulation stays f32 via
    # preferred_element_type); the output keeps the activation dtype.
    compute_dtype = wx.dtype
    if x2.dtype != compute_dtype:
        x2 = x2.astype(compute_dtype)

    budget = _vmem_budget_bytes()
    tm, tn = _choose_tiles(m, dim_in, dim_out,
                           jnp.dtype(compute_dtype).itemsize,
                           jnp.dtype(wx.dtype).itemsize,
                           budget, block_rows, block_cols)

    m_pad = pl.cdiv(m, tm) * tm
    if m_pad != m:                       # only pad when the remainder is nonzero
        x2 = jnp.pad(x2, ((0, m_pad - m), (0, 0)))
    m_tiles = m_pad // tm
    n_tiles = pl.cdiv(dim_out, tn)       # tn divides dim_out or tn == dim_out

    weights_const = (n_tiles == 1)       # constant index_map -> single buffer ok

    cost = pl.CostEstimate(
        flops=4 * m * dim_in * dim_out,
        transcendentals=m * dim_out,
        bytes_accessed=(m * dim_in * jnp.dtype(compute_dtype).itemsize
                        + m * dim_out * jnp.dtype(out_dtype).itemsize
                        + 2 * dim_in * dim_out * jnp.dtype(wx.dtype).itemsize
                        + 2 * dim_out * 4),
    )

    kernel = functools.partial(_geglu_kernel, approximate=approximate)

    def call(single_buffer):
        in_specs = [
            pl.BlockSpec((tm, dim_in), lambda i, j: (i, 0)),     # resident over j
            _block_spec((dim_in, tn), lambda i, j: (0, j), single_buffer=single_buffer),
            _block_spec((dim_in, tn), lambda i, j: (0, j), single_buffer=single_buffer),
            _block_spec((1, tn), lambda i, j: (0, j), single_buffer=single_buffer),
            _block_spec((1, tn), lambda i, j: (0, j), single_buffer=single_buffer),
        ]
        return pl.pallas_call(
            kernel,
            out_shape=jax.ShapeDtypeStruct((m_pad, dim_out), out_dtype),
            grid=(m_tiles, n_tiles),     # rows outer (parallel), dim_out inner
            in_specs=in_specs,
            out_specs=pl.BlockSpec((tm, tn), lambda i, j: (i, j)),
            compiler_params=pltpu.CompilerParams(
                dimension_semantics=("parallel", "arbitrary"),
                vmem_limit_bytes=budget,
            ),
            cost_estimate=cost,
        )(x2, wx, wg, bx, bg)

    if weights_const:
        try:
            out = call(single_buffer=True)
        except Exception:  # fall back if Buffered(1) is unsupported in this jax
            out = call(single_buffer=False)
    else:
        out = call(single_buffer=False)

    if m_pad != m:
        out = out[:m]
    return out.reshape(*orig_shape[:-1], dim_out)


def geglu_ref(x, w, b):
    # Pure-JAX reference mirroring the PyTorch module (exact erf gelu).
    y = jnp.einsum('...i,oi->...o', x, w,
                   precision=jax.lax.Precision.HIGHEST) + b
    h, g = jnp.split(y, 2, axis=-1)
    return h * (0.5 * g * (1.0 + jax.lax.erf(g * _INV_SQRT2)))


if __name__ == "__main__":
    batch, seq, dim_in, dim_out = 2, 128, 128, 256   # proj = nn.Linear(128, 512)

    key = jax.random.PRNGKey(0)
    k_x, k_w, k_b = jax.random.split(key, 3)
    x = jax.random.normal(k_x, (batch, seq, dim_in), dtype=jnp.float32)
    w = jax.random.normal(k_w, (2 * dim_out, dim_in), dtype=jnp.float32) * 0.05
    b = jax.random.normal(k_b, (2 * dim_out,), dtype=jnp.float32) * 0.05

    ref = geglu_ref(x, w, b)

    # 1) f32 path, default (large) tiles.
    wx, wg, bx, bg = prepare_geglu_params(w, b)        # done once at "init"
    out = jax.block_until_ready(geglu_pallas(x, wx, wg, bx, bg))
    np.testing.assert_allclose(np.asarray(out), np.asarray(ref),
                               rtol=1e-3, atol=1e-2)

    # 2) Ragged row count + multi-tile 2-D grid: exercises conditional padding,
    #    the inner dim_out axis and double-buffered weight slabs.
    x_ragged = x[:, :100, :]
    out2 = jax.block_until_ready(
        geglu_pallas(x_ragged, wx, wg, bx, bg, block_rows=96, block_cols=128))
    np.testing.assert_allclose(np.asarray(out2), np.asarray(ref[:, :100, :]),
                               rtol=1e-3, atol=1e-2)

    # 3) bf16 weights + activations on the MXU (f32 accumulation), opt-in.
    wx16, wg16, bx16, bg16 = prepare_geglu_params(w, b, param_dtype=jnp.bfloat16)
    out3 = jax.block_until_ready(geglu_pallas(x, wx16, wg16, bx16, bg16))
    np.testing.assert_allclose(np.asarray(out3), np.asarray(ref),
                               rtol=5e-2, atol=5e-2)

    print("KERNEL_OK")
</pallas_src>

<mosaic_0001>
module attributes {stable_mosaic.version = 11 : i64} {
  func.func @_geglu_kernel(%arg0: i32, %arg1: i32, %arg2: memref<256x128xf32, #tpu.memory_space<vmem>>, %arg3: memref<128x256xf32, #tpu.memory_space<vmem>>, %arg4: memref<128x256xf32, #tpu.memory_space<vmem>>, %arg5: memref<1x256xf32, #tpu.memory_space<vmem>>, %arg6: memref<1x256xf32, #tpu.memory_space<vmem>>, %arg7: memref<256x256xf32, #tpu.memory_space<vmem>>) attributes {dimension_semantics = [#tpu.dimension_semantics<parallel>, #tpu.dimension_semantics<arbitrary>], iteration_bounds = array<i64: 1, 1>, scalar_prefetch = 0 : i64, scratch_operands = 0 : i64, tpu.core_type = #tpu.core_type<tc>, window_params = [{transform_indices = @transform_0, window_bounds = array<i64: 256, 128>}, {pipeline_mode = #tpu.pipeline_mode<synchronous>, transform_indices = @transform_1, window_bounds = array<i64: 128, 256>}, {pipeline_mode = #tpu.pipeline_mode<synchronous>, transform_indices = @transform_2, window_bounds = array<i64: 128, 256>}, {pipeline_mode = #tpu.pipeline_mode<synchronous>, transform_indices = @transform_3, window_bounds = array<i64: 1, 256>}, {pipeline_mode = #tpu.pipeline_mode<synchronous>, transform_indices = @transform_4, window_bounds = array<i64: 1, 256>}, {transform_indices = @transform_5, window_bounds = array<i64: 256, 256>}]} {
    %c0 = arith.constant 0 : index
    %c0_0 = arith.constant 0 : index
    %0 = vector.load %arg2[%c0, %c0_0] : memref<256x128xf32, #tpu.memory_space<vmem>>, vector<256x128xf32>
    %c0_1 = arith.constant 0 : index
    %c0_2 = arith.constant 0 : index
    %1 = vector.load %arg4[%c0_1, %c0_2] : memref<128x256xf32, #tpu.memory_space<vmem>>, vector<128x256xf32>
    %cst = arith.constant dense<0.000000e+00> : vector<256x256xf32>
    %2 = tpu.matmul %0, %1, %cst {dimension_numbers = #tpu.dot_dimension_numbers<[1], [0], [0], [1], [0, 0, 1, 1], [], []>} : vector<256x128xf32>, vector<128x256xf32>, vector<256x256xf32> -> vector<256x256xf32>
    %c0_3 = arith.constant 0 : index
    %c0_4 = arith.constant 0 : index
    %3 = vector.load %arg6[%c0_3, %c0_4] : memref<1x256xf32, #tpu.memory_space<vmem>>, vector<1x256xf32>
    %4 = vector.broadcast %3 : vector<1x256xf32> to vector<256x256xf32>
    %5 = arith.addf %2, %4 : vector<256x256xf32>
    %cst_5 = arith.constant 5.000000e-01 : f32
    %6 = vector.broadcast %cst_5 : f32 to vector<256x256xf32>
    %7 = arith.mulf %6, %5 : vector<256x256xf32>
    %cst_6 = arith.constant 0.707106769 : f32
    %8 = vector.broadcast %cst_6 : f32 to vector<256x256xf32>
    %9 = arith.mulf %5, %8 : vector<256x256xf32>
    %10 = math.erf %9 : vector<256x256xf32>
    %cst_7 = arith.constant 1.000000e+00 : f32
    %11 = vector.broadcast %cst_7 : f32 to vector<256x256xf32>
    %12 = arith.addf %11, %10 : vector<256x256xf32>
    %13 = arith.mulf %7, %12 : vector<256x256xf32>
    %c0_8 = arith.constant 0 : index
    %c0_9 = arith.constant 0 : index
    %14 = vector.load %arg3[%c0_8, %c0_9] : memref<128x256xf32, #tpu.memory_space<vmem>>, vector<128x256xf32>
    %cst_10 = arith.constant dense<0.000000e+00> : vector<256x256xf32>
    %15 = tpu.matmul %0, %14, %cst_10 {dimension_numbers = #tpu.dot_dimension_numbers<[1], [0], [0], [1], [0, 0, 1, 1], [], []>} : vector<256x128xf32>, vector<128x256xf32>, vector<256x256xf32> -> vector<256x256xf32>
    %c0_11 = arith.constant 0 : index
    %c0_12 = arith.constant 0 : index
    %16 = vector.load %arg5[%c0_11, %c0_12] : memref<1x256xf32, #tpu.memory_space<vmem>>, vector<1x256xf32>
    %17 = vector.broadcast %16 : vector<1x256xf32> to vector<256x256xf32>
    %18 = arith.addf %15, %17 : vector<256x256xf32>
    %19 = arith.mulf %18, %13 : vector<256x256xf32>
    %c0_13 = arith.constant 0 : index
    %c0_14 = arith.constant 0 : index
    %20 = vector.load %arg7[%c0_13, %c0_14] : memref<256x256xf32, #tpu.memory_space<vmem>>, vector<256x256xf32>
    tpu.vector_store %arg7[%c0_13, %c0_14], %19 {strides = array<i32>} : memref<256x256xf32, #tpu.memory_space<vmem>>, vector<256x256xf32>,
    return
  }
  func.func @transform_0(%arg0: i32, %arg1: i32) -> (i32, i32) {
    %c0_i32 = arith.constant 0 : i32
    %c0_i32_0 = arith.constant 0 : i32
    return %arg0, %c0_i32 : i32, i32
  }
  func.func @transform_1(%arg0: i32, %arg1: i32) -> (i32, i32) {
    %c0_i32 = arith.constant 0 : i32
    %c0_i32_0 = arith.constant 0 : i32
    return %c0_i32, %arg1 : i32, i32
  }
  func.func @transform_2(%arg0: i32, %arg1: i32) -> (i32, i32) {
    %c0_i32 = arith.constant 0 : i32
    %c0_i32_0 = arith.constant 0 : i32
    return %c0_i32, %arg1 : i32, i32
  }
  func.func @transform_3(%arg0: i32, %arg1: i32) -> (i32, i32) {
    %c0_i32 = arith.constant 0 : i32
    %c0_i32_0 = arith.constant 0 : i32
    return %c0_i32, %arg1 : i32, i32
  }
  func.func @transform_4(%arg0: i32, %arg1: i32) -> (i32, i32) {
    %c0_i32 = arith.constant 0 : i32
    %c0_i32_0 = arith.constant 0 : i32
    return %c0_i32, %arg1 : i32, i32
  }
  func.func @transform_5(%arg0: i32, %arg1: i32) -> (i32, i32) {
    %c0_i32 = arith.constant 0 : i32
    return %arg0, %arg1 : i32, i32
  }
}

module attributes {stable_mosaic.version = 11 : i64} {
  func.func @_geglu_kernel(%arg0: i32, %arg1: i32, %arg2: memref<256x128xf32, #tpu.memory_space<vmem>>, %arg3: memref<128x256xf32, #tpu.memory_space<vmem>>, %arg4: memref<128x256xf32, #tpu.memory_space<vmem>>, %arg5: memref<1x256xf32, #tpu.memory_space<vmem>>, %arg6: memref<1x256xf32, #tpu.memory_space<vmem>>, %arg7: memref<256x256xf32, #tpu.memory_space<vmem>>) attributes {dimension_semantics = [#tpu.dimension_semantics<parallel>, #tpu.dimension_semantics<arbitrary>], iteration_bounds = array<i64: 1, 1>, scalar_prefetch = 0 : i64, scratch_operands = 0 : i64, tpu.core_type = #tpu.core_type<tc>, window_params = [{transform_indices = @transform_0, window_bounds = array<i64: 256, 128>}, {transform_indices = @transform_1, window_bounds = array<i64: 128, 256>}, {transform_indices = @transform_2, window_bounds = array<i64: 128, 256>}, {transform_indices = @transform_3, window_bounds = array<i64: 1, 256>}, {transform_indices = @transform_4, window_bounds = array<i64: 1, 256>}, {transform_indices = @transform_5, window_bounds = array<i64: 256, 256>}]} {
    %c0 = arith.constant 0 : index
    %c0_0 = arith.constant 0 : index
    %0 = vector.load %arg2[%c0, %c0_0] : memref<256x128xf32, #tpu.memory_space<vmem>>, vector<256x128xf32>
    %c0_1 = arith.constant 0 : index
    %c0_2 = arith.constant 0 : index
    %1 = vector.load %arg4[%c0_1, %c0_2] : memref<128x256xf32, #tpu.memory_space<vmem>>, vector<128x256xf32>
    %cst = arith.constant dense<0.000000e+00> : vector<256x256xf32>
    %2 = tpu.matmul %0, %1, %cst {dimension_numbers = #tpu.dot_dimension_numbers<[1], [0], [0], [1], [0, 0, 1, 1], [], []>} : vector<256x128xf32>, vector<128x256xf32>, vector<256x256xf32> -> vector<256x256xf32>
    %c0_3 = arith.constant 0 : index
    %c0_4 = arith.constant 0 : index
    %3 = vector.load %arg6[%c0_3, %c0_4] : memref<1x256xf32, #tpu.memory_space<vmem>>, vector<1x256xf32>
    %4 = vector.broadcast %3 : vector<1x256xf32> to vector<256x256xf32>
    %5 = arith.addf %2, %4 : vector<256x256xf32>
    %cst_5 = arith.constant 5.000000e-01 : f32
    %6 = vector.broadcast %cst_5 : f32 to vector<256x256xf32>
    %7 = arith.mulf %6, %5 : vector<256x256xf32>
    %cst_6 = arith.constant 0.707106769 : f32
    %8 = vector.broadcast %cst_6 : f32 to vector<256x256xf32>
    %9 = arith.mulf %5, %8 : vector<256x256xf32>
    %10 = math.erf %9 : vector<256x256xf32>
    %cst_7 = arith.constant 1.000000e+00 : f32
    %11 = vector.broadcast %cst_7 : f32 to vector<256x256xf32>
    %12 = arith.addf %11, %10 : vector<256x256xf32>
    %13 = arith.mulf %7, %12 : vector<256x256xf32>
    %c0_8 = arith.constant 0 : index
    %c0_9 = arith.constant 0 : index
    %14 = vector.load %arg3[%c0_8, %c0_9] : memref<128x256xf32, #tpu.memory_space<vmem>>, vector<128x256xf32>
    %cst_10 = arith.constant dense<0.000000e+00> : vector<256x256xf32>
    %15 = tpu.matmul %0, %14, %cst_10 {dimension_numbers = #tpu.dot_dimension_numbers<[1], [0], [0], [1], [0, 0, 1, 1], [], []>} : vector<256x128xf32>, vector<128x256xf32>, vector<256x256xf32> -> vector<256x256xf32>
    %c0_11 = arith.constant 0 : index
    %c0_12 = arith.constant 0 : index
    %16 = vector.load %arg5[%c0_11, %c0_12] : memref<1x256xf32, #tpu.memory_space<vmem>>, vector<1x256xf32>
    %17 = vector.broadcast %16 : vector<1x256xf32> to vector<256x256xf32>
    %18 = arith.addf %15, %17 : vector<256x256xf32>
    %19 = arith.mulf %18, %13 : vector<256x256xf32>
    %c0_13 = arith.constant 0 : index
    %c0_14 = arith.constant 0 : index
    %20 = vector.load %arg7[%c0_13, %c0_14] : memref<256x256xf32, #tpu.memory_space<vmem>>, vector<256x256xf32>
    tpu.vector_store %arg7[%c0_13, %c0_14], %19 {strides = array<i32>} : memref<256x256xf32, #tpu.memory_space<vmem>>, vector<256x256xf32>,
    return
  }
  func.func @transform_0(%arg0: i32, %arg1: i32) -> (i32, i32) {
    %c0_i32 = arith.constant 0 : i32
    %c0_i32_0 = arith.constant 0 : i32
    return %arg0, %c0_i32 : i32, i32
  }
  func.func @transform_1(%arg0: i32, %arg1: i32) -> (i32, i32) {
    %c0_i32 = arith.constant 0 : i32
    %c0_i32_0 = arith.constant 0 : i32
    return %c0_i32, %arg1 : i32, i32
  }
  func.func @transform_2(%arg0: i32, %arg1: i32) -> (i32, i32) {
    %c0_i32 = arith.constant 0 : i32
    %c0_i32_0 = arith.constant 0 : i32
    return %c0_i32, %arg1 : i32, i32
  }
  func.func @transform_3(%arg0: i32, %arg1: i32) -> (i32, i32) {
    %c0_i32 = arith.constant 0 : i32
    %c0_i32_0 = arith.constant 0 : i32
    return %c0_i32, %arg1 : i32, i32
  }
  func.func @transform_4(%arg0: i32, %arg1: i32) -> (i32, i32) {
    %c0_i32 = arith.constant 0 : i32
    %c0_i32_0 = arith.constant 0 : i32
    return %c0_i32, %arg1 : i32, i32
  }
  func.func @transform_5(%arg0: i32, %arg1: i32) -> (i32, i32) {
    %c0_i32 = arith.constant 0 : i32
    return %arg0, %arg1 : i32, i32
  }
}

</mosaic_0001>

<llo_original>
// kernel: tpu_custom_call.1
$region0: #{tpu_custom_call.1}
  #allocation0 [shape = 'u32[]', space=smem, size = 0x4, offset = 0x4, fixed_abs, tag = 'smem constant byte address 0x4 - core index']
  #allocation1 [shape = 'u32[144,128]{1,0:T(1,128)}', space=vmem, size = 0x12000, scoped, tag = 'internal scratch']
  %s0 = inlined_call_operand.hbm [shape: f32[256,128], index: 0, kind: input, shape index: {}]
  %s1 = inlined_call_operand.hbm [shape: f32[128,256], index: 1, kind: input, shape index: {}]
  %s2 = inlined_call_operand.hbm [shape: f32[128,256], index: 2, kind: input, shape index: {}]
  %s3 = inlined_call_operand.vmem [shape: f32[1,256], index: 3, kind: input, shape index: {}]
  %s4 = inlined_call_operand.vmem [shape: f32[1,256], index: 4, kind: input, shape index: {}]
  %s5 = inlined_call_operand.hbm [shape: f32[256,256], index: 5, kind: output, shape index: {}]
  %s6 = sld [smem:[#allocation0]]
  $region42: #{tpu_custom_call.1} parent=0
    _
  %s8 = ssub.s32 1, %s6
  %s9 = scalar_select 0, %s8, %s6
  $region1: #{tpu_custom_call.1} parent=0
    #allocation2 [shape = 'u8[131072]{0}', space=vmem, size = 0x20000, scoped, tag = 'input window, operand 0, single buffered']
    #allocation3 [shape = 's32[1]{0}', space=sflag, size = 0x4, scoped, tag = 'scoped memory for tpu_custom_call.1']
    #allocation4 [shape = 's32[1]{0}', space=sflag, size = 0x4, scoped, tag = 'scoped memory for tpu_custom_call.1']
    #allocation5 [shape = 'u8[131072]{0}', space=vmem, size = 0x20000, scoped, tag = 'input window, operand 1, single buffered']
    #allocation6 [shape = 's32[1]{0}', space=sflag, size = 0x4, scoped, tag = 'scoped memory for tpu_custom_call.1']
    #allocation7 [shape = 'u8[131072]{0}', space=vmem, size = 0x20000, scoped, tag = 'input window, operand 2, single buffered']
    #allocation8 [shape = 'u8[262144]{0}', space=vmem, size = 0x40000, scoped, tag = 'output window, operand 0, single buffered']
    %10 = vsyncpa [#allocation3], 0
    %11 = vsyncpa [#allocation6], 0
    %12 = vsyncpa [#allocation4], 0
    // Predicated region
    $region2: #{tpu_custom_call.1} parent=1 // pred_check
      _
    $region3: #{tpu_custom_call.1} parent=1 // pred_check_branch
      %14 = sbr.rel (0) target = $region5
    $region4: #{tpu_custom_call.1} parent=1 // pred_region
      %s16 = ssub.s32 4096, 4096
      %17 = vsyncadd [#allocation3], %s16
      %s18 = sshll.u32 [#allocation2], 4
      %s19 = int_to_ptr.vmem [resolvable:$true] %s18
      %24 = dma.hbm_to_vmem [thread:$0]  %s0, 4096, %s19, [#allocation3], 128, 128, 8
    $region5: #{tpu_custom_call.1} parent=1 // pred_fallthru
      _
    // Predicated region
    $region6: #{tpu_custom_call.1} parent=1 // pred_check
      _
    $region7: #{tpu_custom_call.1} parent=1 // pred_check_branch
      %26 = sbr.rel (0) target = $region9
    $region8: #{tpu_custom_call.1} parent=1 // pred_region
      %s28 = ssub.s32 4096, 4096
      %29 = vsyncadd [#allocation6], %s28
      %s30 = sshll.u32 [#allocation5], 4
      %s31 = int_to_ptr.vmem [resolvable:$true] %s30
      %36 = dma.hbm_to_vmem [thread:$0]  %s1, 4096, %s31, [#allocation6], 256, 256, 16
    $region9: #{tpu_custom_call.1} parent=1 // pred_fallthru
      _
    // Predicated region
    $region10: #{tpu_custom_call.1} parent=1 // pred_check
      _
    $region11: #{tpu_custom_call.1} parent=1 // pred_check_branch
      %38 = sbr.rel (0) target = $region13
    $region12: #{tpu_custom_call.1} parent=1 // pred_region
      %s40 = ssub.s32 4096, 4096
      %41 = vsyncadd [#allocation6], %s40
      %s42 = sshll.u32 [#allocation7], 4
      %s43 = int_to_ptr.vmem [resolvable:$true] %s42
      %48 = dma.hbm_to_vmem [thread:$0]  %s2, 4096, %s43, [#allocation6], 256, 256, 16
    $region13: #{tpu_custom_call.1} parent=1 // pred_fallthru
      _
    // Predicated region
    $region14: #{tpu_custom_call.1} parent=1 // pred_check
      _
    $region15: #{tpu_custom_call.1} parent=1 // pred_check_branch
      %50 = sbr.rel (0) target = $region17
    $region16: #{tpu_custom_call.1} parent=1 // pred_region
      _
    $region17: #{tpu_custom_call.1} parent=1 // pred_fallthru
      _
    // Predicated region
    $region18: #{tpu_custom_call.1} parent=1 // pred_check
      _
    $region19: #{tpu_custom_call.1} parent=1 // pred_check_branch
      %52 = sbr.rel (0) target = $region21
    $region20: #{tpu_custom_call.1} parent=1 // pred_region
      _
    $region21: #{tpu_custom_call.1} parent=1 // pred_fallthru
      _
    // Predicated region
    $region22: #{tpu_custom_call.1} parent=1 // pred_check
      _
    $region23: #{tpu_custom_call.1} parent=1 // pred_check_branch
      %54 = sbr.rel (0) target = $region25
    $region24: #{tpu_custom_call.1} parent=1 // pred_region
      %55 = dma.done [#allocation3], 4096
    $region25: #{tpu_custom_call.1} parent=1 // pred_fallthru
      _
    // Predicated region
    $region26: #{tpu_custom_call.1} parent=1 // pred_check
      _
    $region27: #{tpu_custom_call.1} parent=1 // pred_check_branch
      %57 = sbr.rel (0) target = $region29
    $region28: #{tpu_custom_call.1} parent=1 // pred_region
      %58 = dma.done [#allocation6], 4096
    $region29: #{tpu_custom_call.1} parent=1 // pred_fallthru
      _
    // Predicated region
    $region30: #{tpu_custom_call.1} parent=1 // pred_check
      _
    $region31: #{tpu_custom_call.1} parent=1 // pred_check_branch
      %60 = sbr.rel (0) target = $region33
    $region32: #{tpu_custom_call.1} parent=1 // pred_region
      %61 = dma.done [#allocation6], 4096
    $region33: #{tpu_custom_call.1} parent=1 // pred_fallthru
      _
    %v62 = vld [vmem:[#allocation2] sm:$0xff]
    %v63 = vld [vmem:[#allocation2 + $0x8] sm:$0xff]
    %v64 = vld [vmem:[#allocation2 + $0x10] sm:$0xff]
    %v65 = vld [vmem:[#allocation2 + $0x18] sm:$0xff]
    %v66 = vld [vmem:[#allocation2 + $0x20] sm:$0xff]
    %v67 = vld [vmem:[#allocation2 + $0x28] sm:$0xff]
    %v68 = vld [vmem:[#allocation2 + $0x30] sm:$0xff]
    %v69 = vld [vmem:[#allocation2 + $0x38] sm:$0xff]
    %v70 = vld [vmem:[#allocation2 + $0x40] sm:$0xff]
    %v71 = vld [vmem:[#allocation2 + $0x48] sm:$0xff]
    %v72 = vld [vmem:[#allocation2 + $0x50] sm:$0xff]
    %v73 = vld [vmem:[#allocation2 + $0x58] sm:$0xff]
    %v74 = vld [vmem:[#allocation2 + $0x60] sm:$0xff]
    %v75 = vld [vmem:[#allocation2 + $0x68] sm:$0xff]
    %v76 = vld [vmem:[#allocation2 + $0x70] sm:$0xff]
    %v77 = vld [vmem:[#allocation2 + $0x78] sm:$0xff]
    %v78 = vld [vmem:[#allocation2 + $0x80] sm:$0xff]
    %v79 = vld [vmem:[#allocation2 + $0x88] sm:$0xff]
    %v80 = vld [vmem:[#allocation2 + $0x90] sm:$0xff]
    %v81 = vld [vmem:[#allocation2 + $0x98] sm:$0xff]
    %v82 = vld [vmem:[#allocation2 + $0xa0] sm:$0xff]
    %v83 = vld [vmem:[#allocation2 + $0xa8] sm:$0xff]
    %v84 = vld [vmem:[#allocation2 + $0xb0] sm:$0xff]
    %v85 = vld [vmem:[#allocation2 + $0xb8] sm:$0xff]
    %v86 = vld [vmem:[#allocation2 + $0xc0] sm:$0xff]
    %v87 = vld [vmem:[#allocation2 + $0xc8] sm:$0xff]
    %v88 = vld [vmem:[#allocation2 + $0xd0] sm:$0xff]
    %v89 = vld [vmem:[#allocation2 + $0xd8] sm:$0xff]
    %v90 = vld [vmem:[#allocation2 + $0xe0] sm:$0xff]
    %v91 = vld [vmem:[#allocation2 + $0xe8] sm:$0xff]
    %v92 = vld [vmem:[#allocation2 + $0xf0] sm:$0xff]
    %v93 = vld [vmem:[#allocation2 + $0xf8] sm:$0xff]
    %v94 = vld [vmem:[#allocation7] sm:$0xff]
    %v95 = vld [vmem:[#allocation7 + $0x8] sm:$0xff]
    %v96 = vld [vmem:[#allocation7 + $0x10] sm:$0xff]
    %v97 = vld [vmem:[#allocation7 + $0x18] sm:$0xff]
    %v98 = vld [vmem:[#allocation7 + $0x20] sm:$0xff]
    %v99 = vld [vmem:[#allocation7 + $0x28] sm:$0xff]
    %v100 = vld [vmem:[#allocation7 + $0x30] sm:$0xff]
    %v101 = vld [vmem:[#allocation7 + $0x38] sm:$0xff]
    %v102 = vld [vmem:[#allocation7 + $0x40] sm:$0xff]
    %v103 = vld [vmem:[#allocation7 + $0x48] sm:$0xff]
    %v104 = vld [vmem:[#allocation7 + $0x50] sm:$0xff]
    %v105 = vld [vmem:[#allocation7 + $0x58] sm:$0xff]
    %v106 = vld [vmem:[#allocation7 + $0x60] sm:$0xff]
    %v107 = vld [vmem:[#allocation7 + $0x68] sm:$0xff]
    %v108 = vld [vmem:[#allocation7 + $0x70] sm:$0xff]
    %v109 = vld [vmem:[#allocation7 + $0x78] sm:$0xff]
    %v110 = vld [vmem:[#allocation7 + $0x80] sm:$0xff]
    %v111 = vld [vmem:[#allocation7 + $0x88] sm:$0xff]
    %v112 = vld [vmem:[#allocation7 + $0x90] sm:$0xff]
    %v113 = vld [vmem:[#allocation7 + $0x98] sm:$0xff]
    %v114 = vld [vmem:[#allocation7 + $0xa0] sm:$0xff]
    %v115 = vld [vmem:[#allocation7 + $0xa8] sm:$0xff]
    %v116 = vld [vmem:[#allocation7 + $0xb0] sm:$0xff]
    %v117 = vld [vmem:[#allocation7 + $0xb8] sm:$0xff]
    %v118 = vld [vmem:[#allocation7 + $0xc0] sm:$0xff]
    %v119 = vld [vmem:[#allocation7 + $0xc8] sm:$0xff]
    %v120 = vld [vmem:[#allocation7 + $0xd0] sm:$0xff]
    %v121 = vld [vmem:[#allocation7 + $0xd8] sm:$0xff]
    %v122 = vld [vmem:[#allocation7 + $0xe0] sm:$0xff]
    %v123 = vld [vmem:[#allocation7 + $0xe8] sm:$0xff]
    %v124 = vld [vmem:[#allocation7 + $0xf0] sm:$0xff]
    %v125 = vld [vmem:[#allocation7 + $0xf8] sm:$0xff]
    %v126 = vld [vmem:[%s4] sm:$0x3]
    %v128 = vlaneseq
    %v129 = vshrl.u32 %v128, 7
    %v130 = vsub.s32 0, %v129
    %v131 = vrot.slane %v126, %v130
    %v132 = vlaneseq
    %v133 = vshrl.u32 %v132, 7
    %v134 = vsub.s32 1, %v133
    %v135 = vrot.slane %v126, %v134
    %138 = vmatprep.subr.mxu0 %v95
    %139 = vmatpush1.msra.mxu0 %v94
    %140 = vmatprep.subr.mxu0 %v97
    %141 = vmatpush1.msra.mxu0 %v96
    %142 = vmatprep.subr.mxu0 %v99
    %143 = vmatpush1.msra.mxu0 %v98
    %144 = vmatprep.subr.mxu0 %v101
    %145 = vmatpush1.msra.mxu0 %v100
    %146 = vmatprep.subr.mxu0 %v103
    %147 = vmatpush1.msra.mxu0 %v102
    %148 = vmatprep.subr.mxu0 %v105
    %149 = vmatpush1.msra.mxu0 %v104
    %150 = vmatprep.subr.mxu0 %v107
    %151 = vmatpush1.msra.mxu0 %v106
    %152 = vmatprep.subr.mxu0 %v109
    %153 = vmatpush1.msra.mxu0 %v108
    %154 = vmatprep.subr.mxu0 %v111
    %155 = vmatpush1.msra.mxu0 %v110
    %156 = vmatprep.subr.mxu0 %v113
    %157 = vmatpush1.msra.mxu0 %v112
    %158 = vmatprep.subr.mxu0 %v115
    %159 = vmatpush1.msra.mxu0 %v114
    %160 = vmatprep.subr.mxu0 %v117
    %161 = vmatpush1.msra.mxu0 %v116
    %162 = vmatprep.subr.mxu0 %v119
    %163 = vmatpush1.msra.mxu0 %v118
    %164 = vmatprep.subr.mxu0 %v121
    %165 = vmatpush1.msra.mxu0 %v120
    %166 = vmatprep.subr.mxu0 %v123
    %167 = vmatpush1.msra.mxu0 %v122
    %168 = vmatprep.subr.mxu0 %v125
    %169 = vmatpush1.msra.mxu0 %v124
    %170 = vmatprep.subr.mxu0 0.0
    %171 = vmatpush1.msra.mxu0 0.0
    %172 = vmatprep.subr.mxu0 0.0
    %173 = vmatpush1.msra.mxu0 0.0
    %174 = vmatprep.subr.mxu0 0.0
    %175 = vmatpush1.msra.mxu0 0.0
    %176 = vmatprep.subr.mxu0 0.0
    %177 = vmatpush1.msra.mxu0 0.0
    %178 = vmatprep.subr.mxu0 0.0
    %179 = vmatpush1.msra.mxu0 0.0
    %180 = vmatprep.subr.mxu0 0.0
    %181 = vmatpush1.msra.mxu0 0.0
    %182 = vmatprep.subr.mxu0 0.0
    %183 = vmatpush1.msra.mxu0 0.0
    %184 = vmatprep.subr.mxu0 0.0
    %185 = vmatpush1.msra.mxu0 0.0
    %186 = vmatprep.subr.mxu0 0.0
    %187 = vmatpush1.msra.mxu0 0.0
    %188 = vmatprep.subr.mxu0 0.0
    %189 = vmatpush1.msra.mxu0 0.0
    %190 = vmatprep.subr.mxu0 0.0
    %191 = vmatpush1.msra.mxu0 0.0
    %192 = vmatprep.subr.mxu0 0.0
    %193 = vmatpush1.msra.mxu0 0.0
    %194 = vmatprep.subr.mxu0 0.0
    %195 = vmatpush1.msra.mxu0 0.0
    %196 = vmatprep.subr.mxu0 0.0
    %197 = vmatpush1.msra.mxu0 0.0
    %198 = vmatprep.subr.mxu0 0.0
    %199 = vmatpush1.msra.mxu0 0.0
    %200 = vmatprep.subr.mxu0 0.0
    %201 = vmatpush1.msra.mxu0 0.0
    %202 = vmatprep.mubr.f32.mxu0 0.0
    %203 = vmatmul.mubr.f32.gmra.mrb[0].mxu0 %v62
    %v204 = vpop.f32.mrb[0].mxu0
    %v205 = vadd.f32 %v131, %v204
    %v206 = vpop.f32.mrb[0].mxu0
    %v207 = vadd.f32 %v135, %v206
    %208 = vmatprep.mubr.f32.mxu0 0.0
    %209 = vmatmul.mubr.f32.gmra.mrb[0].mxu0 %v63
    %v210 = vpop.f32.mrb[0].mxu0
    %v211 = vadd.f32 %v131, %v210
    %v212 = vpop.f32.mrb[0].mxu0
    %v213 = vadd.f32 %v135, %v212
    %214 = vmatprep.mubr.f32.mxu0 0.0
    %215 = vmatmul.mubr.f32.gmra.mrb[0].mxu0 %v64
    %v216 = vpop.f32.mrb[0].mxu0
    %v217 = vadd.f32 %v131, %v216
    %v218 = vpop.f32.mrb[0].mxu0
    %v219 = vadd.f32 %v135, %v218
    %220 = vmatprep.mubr.f32.mxu0 0.0
    %221 = vmatmul.mubr.f32.gmra.mrb[0].mxu0 %v65
    %v222 = vpop.f32.mrb[0].mxu0
    %v223 = vadd.f32 %v131, %v222
    %v224 = vpop.f32.mrb[0].mxu0
    %v225 = vadd.f32 %v135, %v224
    %226 = vmatprep.mubr.f32.mxu0 0.0
    %227 = vmatmul.mubr.f32.gmra.mrb[0].mxu0 %v66
    %v228 = vpop.f32.mrb[0].mxu0
    %v229 = vadd.f32 %v131, %v228
    %v230 = vpop.f32.mrb[0].mxu0
    %v231 = vadd.f32 %v135, %v230
    %232 = vmatprep.mubr.f32.mxu0 0.0
    %233 = vmatmul.mubr.f32.gmra.mrb[0].mxu0 %v67
    %v234 = vpop.f32.mrb[0].mxu0
    %v235 = vadd.f32 %v131, %v234
    %v236 = vpop.f32.mrb[0].mxu0
    %v237 = vadd.f32 %v135, %v236
    %238 = vmatprep.mubr.f32.mxu0 0.0
    %239 = vmatmul.mubr.f32.gmra.mrb[0].mxu0 %v68
    %v240 = vpop.f32.mrb[0].mxu0
    %v241 = vadd.f32 %v131, %v240
    %v242 = vpop.f32.mrb[0].mxu0
    %v243 = vadd.f32 %v135, %v242
    %244 = vmatprep.mubr.f32.mxu0 0.0
    %245 = vmatmul.mubr.f32.gmra.mrb[0].mxu0 %v69
    %v246 = vpop.f32.mrb[0].mxu0
    %v247 = vadd.f32 %v131, %v246
    %v248 = vpop.f32.mrb[0].mxu0
    %v249 = vadd.f32 %v135, %v248
    %250 = vmatprep.mubr.f32.mxu0 0.0
    %251 = vmatmul.mubr.f32.gmra.mrb[0].mxu0 %v70
    %v252 = vpop.f32.mrb[0].mxu0
    %v253 = vadd.f32 %v131, %v252
    %v254 = vpop.f32.mrb[0].mxu0
    %v255 = vadd.f32 %v135, %v254
    %256 = vmatprep.mubr.f32.mxu0 0.0
    %257 = vmatmul.mubr.f32.gmra.mrb[0].mxu0 %v71
    %v258 = vpop.f32.mrb[0].mxu0
    %v259 = vadd.f32 %v131, %v258
    %v260 = vpop.f32.mrb[0].mxu0
    %v261 = vadd.f32 %v135, %v260
    %262 = vmatprep.mubr.f32.mxu0 0.0
    %263 = vmatmul.mubr.f32.gmra.mrb[0].mxu0 %v72
    %v264 = vpop.f32.mrb[0].mxu0
    %v265 = vadd.f32 %v131, %v264
    %v266 = vpop.f32.mrb[0].mxu0
    %v267 = vadd.f32 %v135, %v266
    %268 = vmatprep.mubr.f32.mxu0 0.0
    %269 = vmatmul.mubr.f32.gmra.mrb[0].mxu0 %v73
    %v270 = vpop.f32.mrb[0].mxu0
    %v271 = vadd.f32 %v131, %v270
    %v272 = vpop.f32.mrb[0].mxu0
    %v273 = vadd.f32 %v135, %v272
    %274 = vmatprep.mubr.f32.mxu0 0.0
    %275 = vmatmul.mubr.f32.gmra.mrb[0].mxu0 %v74
    %v276 = vpop.f32.mrb[0].mxu0
    %v277 = vadd.f32 %v131, %v276
    %v278 = vpop.f32.mrb[0].mxu0
    %v279 = vadd.f32 %v135, %v278
    %280 = vmatprep.mubr.f32.mxu0 0.0
    %281 = vmatmul.mubr.f32.gmra.mrb[0].mxu0 %v75
    %v282 = vpop.f32.mrb[0].mxu0
    %v283 = vadd.f32 %v131, %v282
    %v284 = vpop.f32.mrb[0].mxu0
    %v285 = vadd.f32 %v135, %v284
    %286 = vmatprep.mubr.f32.mxu0 0.0
    %287 = vmatmul.mubr.f32.gmra.mrb[0].mxu0 %v76
    %v288 = vpop.f32.mrb[0].mxu0
    %v289 = vadd.f32 %v131, %v288
    %v290 = vpop.f32.mrb[0].mxu0
    %v291 = vadd.f32 %v135, %v290
    %292 = vmatprep.mubr.f32.mxu0 0.0
    %293 = vmatmul.mubr.f32.gmra.mrb[0].mxu0 %v77
    %v294 = vpop.f32.mrb[0].mxu0
    %v295 = vadd.f32 %v131, %v294
    %v296 = vpop.f32.mrb[0].mxu0
    %v297 = vadd.f32 %v135, %v296
    %298 = vmatprep.mubr.f32.mxu0 0.0
    %299 = vmatmul.mubr.f32.gmra.mrb[0].mxu0 %v78
    %v300 = vpop.f32.mrb[0].mxu0
    %v301 = vadd.f32 %v131, %v300
    %v302 = vpop.f32.mrb[0].mxu0
    %v303 = vadd.f32 %v135, %v302
    %304 = vmatprep.mubr.f32.mxu0 0.0
    %305 = vmatmul.mubr.f32.gmra.mrb[0].mxu0 %v79
    %v306 = vpop.f32.mrb[0].mxu0
    %v307 = vadd.f32 %v131, %v306
    %v308 = vpop.f32.mrb[0].mxu0
    %v309 = vadd.f32 %v135, %v308
    %310 = vmatprep.mubr.f32.mxu0 0.0
    %311 = vmatmul.mubr.f32.gmra.mrb[0].mxu0 %v80
    %v312 = vpop.f32.mrb[0].mxu0
    %v313 = vadd.f32 %v131, %v312
    %v314 = vpop.f32.mrb[0].mxu0
    %v315 = vadd.f32 %v135, %v314
    %316 = vmatprep.mubr.f32.mxu0 0.0
    %317 = vmatmul.mubr.f32.gmra.mrb[0].mxu0 %v81
    %v318 = vpop.f32.mrb[0].mxu0
    %v319 = vadd.f32 %v131, %v318
    %v320 = vpop.f32.mrb[0].mxu0
    %v321 = vadd.f32 %v135, %v320
    %322 = vmatprep.mubr.f32.mxu0 0.0
    %323 = vmatmul.mubr.f32.gmra.mrb[0].mxu0 %v82
    %v324 = vpop.f32.mrb[0].mxu0
    %v325 = vadd.f32 %v131, %v324
    %v326 = vpop.f32.mrb[0].mxu0
    %v327 = vadd.f32 %v135, %v326
    %328 = vmatprep.mubr.f32.mxu0 0.0
    %329 = vmatmul.mubr.f32.gmra.mrb[0].mxu0 %v83
    %v330 = vpop.f32.mrb[0].mxu0
    %v331 = vadd.f32 %v131, %v330
    %v332 = vpop.f32.mrb[0].mxu0
    %v333 = vadd.f32 %v135, %v332
    %334 = vmatprep.mubr.f32.mxu0 0.0
    %335 = vmatmul.mubr.f32.gmra.mrb[0].mxu0 %v84
    %v336 = vpop.f32.mrb[0].mxu0
    %v337 = vadd.f32 %v131, %v336
    %v338 = vpop.f32.mrb[0].mxu0
    %v339 = vadd.f32 %v135, %v338
    %340 = vmatprep.mubr.f32.mxu0 0.0
    %341 = vmatmul.mubr.f32.gmra.mrb[0].mxu0 %v85
    %v342 = vpop.f32.mrb[0].mxu0
    %v343 = vadd.f32 %v131, %v342
    %v344 = vpop.f32.mrb[0].mxu0
    %v345 = vadd.f32 %v135, %v344
    %346 = vmatprep.mubr.f32.mxu0 0.0
    %347 = vmatmul.mubr.f32.gmra.mrb[0].mxu0 %v86
    %v348 = vpop.f32.mrb[0].mxu0
    %v349 = vadd.f32 %v131, %v348
    %v350 = vpop.f32.mrb[0].mxu0
    %v351 = vadd.f32 %v135, %v350
    %352 = vmatprep.mubr.f32.mxu0 0.0
    %353 = vmatmul.mubr.f32.gmra.mrb[0].mxu0 %v87
    %v354 = vpop.f32.mrb[0].mxu0
    %v355 = vadd.f32 %v131, %v354
    %v356 = vpop.f32.mrb[0].mxu0
    %v357 = vadd.f32 %v135, %v356
    %358 = vmatprep.mubr.f32.mxu0 0.0
    %359 = vmatmul.mubr.f32.gmra.mrb[0].mxu0 %v88
    %v360 = vpop.f32.mrb[0].mxu0
    %v361 = vadd.f32 %v131, %v360
    %v362 = vpop.f32.mrb[0].mxu0
    %v363 = vadd.f32 %v135, %v362
    %364 = vmatprep.mubr.f32.mxu0 0.0
    %365 = vmatmul.mubr.f32.gmra.mrb[0].mxu0 %v89
    %v366 = vpop.f32.mrb[0].mxu0
    %v367 = vadd.f32 %v131, %v366
    %v368 = vpop.f32.mrb[0].mxu0
    %v369 = vadd.f32 %v135, %v368
    %370 = vmatprep.mubr.f32.mxu0 0.0
    %371 = vmatmul.mubr.f32.gmra.mrb[0].mxu0 %v90
    %v372 = vpop.f32.mrb[0].mxu0
    %v373 = vadd.f32 %v131, %v372
    %v374 = vpop.f32.mrb[0].mxu0
    %v375 = vadd.f32 %v135, %v374
    %376 = vmatprep.mubr.f32.mxu0 0.0
    %377 = vmatmul.mubr.f32.gmra.mrb[0].mxu0 %v91
    %v378 = vpop.f32.mrb[0].mxu0
    %v379 = vadd.f32 %v131, %v378
    %v380 = vpop.f32.mrb[0].mxu0
    %v381 = vadd.f32 %v135, %v380
    %382 = vmatprep.mubr.f32.mxu0 0.0
    %383 = vmatmul.mubr.f32.gmra.mrb[0].mxu0 %v92
    %v384 = vpop.f32.mrb[0].mxu0
    %v385 = vadd.f32 %v131, %v384
    %v386 = vpop.f32.mrb[0].mxu0
    %v387 = vadd.f32 %v135, %v386
    %388 = vmatprep.mubr.f32.mxu0 0.0
    %389 = vmatmul.mubr.f32.gmra.mrb[0].mxu0 %v93
    %v390 = vpop.f32.mrb[0].mxu0
    %v391 = vadd.f32 %v131, %v390
    %v392 = vpop.f32.mrb[0].mxu0
    %v393 = vadd.f32 %v135, %v392
    %394 = vdwg.mxu0
    %v395 = vmul.f32 %v205, 0.5
    %v396 = vmul.f32 %v207, 0.5
    %v397 = vmul.f32 %v211, 0.5
    %v398 = vmul.f32 %v213, 0.5
    %v399 = vmul.f32 %v217, 0.5
    %v400 = vmul.f32 %v219, 0.5
    %v401 = vmul.f32 %v223, 0.5
    %v402 = vmul.f32 %v225, 0.5
    %v403 = vmul.f32 %v229, 0.5
    %v404 = vmul.f32 %v231, 0.5
    %v405 = vmul.f32 %v235, 0.5
    %v406 = vmul.f32 %v237, 0.5
    %v407 = vmul.f32 %v241, 0.5
    %v408 = vmul.f32 %v243, 0.5
    %v409 = vmul.f32 %v247, 0.5
    %v410 = vmul.f32 %v249, 0.5
    %v411 = vmul.f32 %v253, 0.5
    %v412 = vmul.f32 %v255, 0.5
    %v413 = vmul.f32 %v259, 0.5
    %v414 = vmul.f32 %v261, 0.5
    %v415 = vmul.f32 %v265, 0.5
    %v416 = vmul.f32 %v267, 0.5
    %v417 = vmul.f32 %v271, 0.5
    %v418 = vmul.f32 %v273, 0.5
    %v419 = vmul.f32 %v277, 0.5
    %v420 = vmul.f32 %v279, 0.5
    %v421 = vmul.f32 %v283, 0.5
    %v422 = vmul.f32 %v285, 0.5
    %v423 = vmul.f32 %v289, 0.5
    %v424 = vmul.f32 %v291, 0.5
    %v425 = vmul.f32 %v295, 0.5
    %v426 = vmul.f32 %v297, 0.5
    %v427 = vmul.f32 %v301, 0.5
    %v428 = vmul.f32 %v303, 0.5
    %v429 = vmul.f32 %v307, 0.5
    %v430 = vmul.f32 %v309, 0.5
    %v431 = vmul.f32 %v313, 0.5
    %v432 = vmul.f32 %v315, 0.5
    %v433 = vmul.f32 %v319, 0.5
    %v434 = vmul.f32 %v321, 0.5
    %v435 = vmul.f32 %v325, 0.5
    %v436 = vmul.f32 %v327, 0.5
    %v437 = vmul.f32 %v331, 0.5
    %v438 = vmul.f32 %v333, 0.5
    %v439 = vmul.f32 %v337, 0.5
    %v440 = vmul.f32 %v339, 0.5
    %v441 = vmul.f32 %v343, 0.5
    %v442 = vmul.f32 %v345, 0.5
    %v443 = vmul.f32 %v349, 0.5
    %v444 = vmul.f32 %v351, 0.5
    %v445 = vmul.f32 %v355, 0.5
    %v446 = vmul.f32 %v357, 0.5
    %v447 = vmul.f32 %v361, 0.5
    %v448 = vmul.f32 %v363, 0.5
    %v449 = vmul.f32 %v367, 0.5
    %v450 = vmul.f32 %v369, 0.5
    %v451 = vmul.f32 %v373, 0.5
    %v452 = vmul.f32 %v375, 0.5
    %v453 = vmul.f32 %v379, 0.5
    %v454 = vmul.f32 %v381, 0.5
    %v455 = vmul.f32 %v385, 0.5
    %v456 = vmul.f32 %v387, 0.5
    %v457 = vmul.f32 %v391, 0.5
    %v458 = vmul.f32 %v393, 0.5
    %v459 = vmul.f32 %v205, 0.70710677
    %v460 = vmul.f32 %v207, 0.70710677
    %v461 = vmul.f32 %v211, 0.70710677
    %v462 = vmul.f32 %v213, 0.70710677
    %v463 = vmul.f32 %v217, 0.70710677
    %v464 = vmul.f32 %v219, 0.70710677
    %v465 = vmul.f32 %v223, 0.70710677
    %v466 = vmul.f32 %v225, 0.70710677
    %v467 = vmul.f32 %v229, 0.70710677
    %v468 = vmul.f32 %v231, 0.70710677
    %v469 = vmul.f32 %v235, 0.70710677
    %v470 = vmul.f32 %v237, 0.70710677
    %v471 = vmul.f32 %v241, 0.70710677
    %v472 = vmul.f32 %v243, 0.70710677
    %v473 = vmul.f32 %v247, 0.70710677
    %v474 = vmul.f32 %v249, 0.70710677
    %v475 = vmul.f32 %v253, 0.70710677
    %v476 = vmul.f32 %v255, 0.70710677
    %v477 = vmul.f32 %v259, 0.70710677
    %v478 = vmul.f32 %v261, 0.70710677
    %v479 = vmul.f32 %v265, 0.70710677
    %v480 = vmul.f32 %v267, 0.70710677
    %v481 = vmul.f32 %v271, 0.70710677
    %v482 = vmul.f32 %v273, 0.70710677
    %v483 = vmul.f32 %v277, 0.70710677
    %v484 = vmul.f32 %v279, 0.70710677
    %v485 = vmul.f32 %v283, 0.70710677
    %v486 = vmul.f32 %v285, 0.70710677
    %v487 = vmul.f32 %v289, 0.70710677
    %v488 = vmul.f32 %v291, 0.70710677
    %v489 = vmul.f32 %v295, 0.70710677
    %v490 = vmul.f32 %v297, 0.70710677
    %v491 = vmul.f32 %v301, 0.70710677
    %v492 = vmul.f32 %v303, 0.70710677
    %v493 = vmul.f32 %v307, 0.70710677
    %v494 = vmul.f32 %v309, 0.70710677
    %v495 = vmul.f32 %v313, 0.70710677
    %v496 = vmul.f32 %v315, 0.70710677
    %v497 = vmul.f32 %v319, 0.70710677
    %v498 = vmul.f32 %v321, 0.70710677
    %v499 = vmul.f32 %v325, 0.70710677
    %v500 = vmul.f32 %v327, 0.70710677
    %v501 = vmul.f32 %v331, 0.70710677
    %v502 = vmul.f32 %v333, 0.70710677
    %v503 = vmul.f32 %v337, 0.70710677
    %v504 = vmul.f32 %v339, 0.70710677
    %v505 = vmul.f32 %v343, 0.70710677
    %v506 = vmul.f32 %v345, 0.70710677
    %v507 = vmul.f32 %v349, 0.70710677
    %v508 = vmul.f32 %v351, 0.70710677
    %v509 = vmul.f32 %v355, 0.70710677
    %v510 = vmul.f32 %v357, 0.70710677
    %v511 = vmul.f32 %v361, 0.70710677
    %v512 = vmul.f32 %v363, 0.70710677
    %v513 = vmul.f32 %v367, 0.70710677
    %v514 = vmul.f32 %v369, 0.70710677
    %v515 = vmul.f32 %v373, 0.70710677
    %v516 = vmul.f32 %v375, 0.70710677
    %v517 = vmul.f32 %v379, 0.70710677
    %v518 = vmul.f32 %v381, 0.70710677
    %v519 = vmul.f32 %v385, 0.70710677
    %v520 = vmul.f32 %v387, 0.70710677
    %v521 = vmul.f32 %v391, 0.70710677
    %v522 = vmul.f32 %v393, 0.70710677
    %v523 = verf.f32.pop %v459
    %v524 = verf.f32.pop %v460
    %v525 = verf.f32.pop %v461
    %v526 = verf.f32.pop %v462
    %v527 = verf.f32.pop %v463
    %v528 = verf.f32.pop %v464
    %v529 = verf.f32.pop %v465
    %v530 = verf.f32.pop %v466
    %v531 = verf.f32.pop %v467
    %v532 = verf.f32.pop %v468
    %v533 = verf.f32.pop %v469
    %v534 = verf.f32.pop %v470
    %v535 = verf.f32.pop %v471
    %v536 = verf.f32.pop %v472
    %v537 = verf.f32.pop %v473
    %v538 = verf.f32.pop %v474
    %v539 = verf.f32.pop %v475
    %v540 = verf.f32.pop %v476
    %v541 = verf.f32.pop %v477
    %v542 = verf.f32.pop %v478
    %v543 = verf.f32.pop %v479
    %v544 = verf.f32.pop %v480
    %v545 = verf.f32.pop %v481
    %v546 = verf.f32.pop %v482
    %v547 = verf.f32.pop %v483
    %v548 = verf.f32.pop %v484
    %v549 = verf.f32.pop %v485
    %v550 = verf.f32.pop %v486
    %v551 = verf.f32.pop %v487
    %v552 = verf.f32.pop %v488
    %v553 = verf.f32.pop %v489
    %v554 = verf.f32.pop %v490
    %v555 = verf.f32.pop %v491
    %v556 = verf.f32.pop %v492
    %v557 = verf.f32.pop %v493
    %v558 = verf.f32.pop %v494
    %v559 = verf.f32.pop %v495
    %v560 = verf.f32.pop %v496
    %v561 = verf.f32.pop %v497
    %v562 = verf.f32.pop %v498
    %v563 = verf.f32.pop %v499
    %v564 = verf.f32.pop %v500
    %v565 = verf.f32.pop %v501
    %v566 = verf.f32.pop %v502
    %v567 = verf.f32.pop %v503
    %v568 = verf.f32.pop %v504
    %v569 = verf.f32.pop %v505
    %v570 = verf.f32.pop %v506
    %v571 = verf.f32.pop %v507
    %v572 = verf.f32.pop %v508
    %v573 = verf.f32.pop %v509
    %v574 = verf.f32.pop %v510
    %v575 = verf.f32.pop %v511
    %v576 = verf.f32.pop %v512
    %v577 = verf.f32.pop %v513
    %v578 = verf.f32.pop %v514
    %v579 = verf.f32.pop %v515
    %v580 = verf.f32.pop %v516
    %v581 = verf.f32.pop %v517
    %v582 = verf.f32.pop %v518
    %v583 = verf.f32.pop %v519
    %v584 = verf.f32.pop %v520
    %v585 = verf.f32.pop %v521
    %v586 = verf.f32.pop %v522
    %v587 = vadd.f32 %v523, 1.0
    %v588 = vadd.f32 %v524, 1.0
    %v589 = vadd.f32 %v525, 1.0
    %v590 = vadd.f32 %v526, 1.0
    %v591 = vadd.f32 %v527, 1.0
    %v592 = vadd.f32 %v528, 1.0
    %v593 = vadd.f32 %v529, 1.0
    %v594 = vadd.f32 %v530, 1.0
    %v595 = vadd.f32 %v531, 1.0
    %v596 = vadd.f32 %v532, 1.0
    %v597 = vadd.f32 %v533, 1.0
    %v598 = vadd.f32 %v534, 1.0
    %v599 = vadd.f32 %v535, 1.0
    %v600 = vadd.f32 %v536, 1.0
    %v601 = vadd.f32 %v537, 1.0
    %v602 = vadd.f32 %v538, 1.0
    %v603 = vadd.f32 %v539, 1.0
    %v604 = vadd.f32 %v540, 1.0
    %v605 = vadd.f32 %v541, 1.0
    %v606 = vadd.f32 %v542, 1.0
    %v607 = vadd.f32 %v543, 1.0
    %v608 = vadd.f32 %v544, 1.0
    %v609 = vadd.f32 %v545, 1.0
    %v610 = vadd.f32 %v546, 1.0
    %v611 = vadd.f32 %v547, 1.0
    %v612 = vadd.f32 %v548, 1.0
    %v613 = vadd.f32 %v549, 1.0
    %v614 = vadd.f32 %v550, 1.0
    %v615 = vadd.f32 %v551, 1.0
    %v616 = vadd.f32 %v552, 1.0
    %v617 = vadd.f32 %v553, 1.0
    %v618 = vadd.f32 %v554, 1.0
    %v619 = vadd.f32 %v555, 1.0
    %v620 = vadd.f32 %v556, 1.0
    %v621 = vadd.f32 %v557, 1.0
    %v622 = vadd.f32 %v558, 1.0
    %v623 = vadd.f32 %v559, 1.0
    %v624 = vadd.f32 %v560, 1.0
    %v625 = vadd.f32 %v561, 1.0
    %v626 = vadd.f32 %v562, 1.0
    %v627 = vadd.f32 %v563, 1.0
    %v628 = vadd.f32 %v564, 1.0
    %v629 = vadd.f32 %v565, 1.0
    %v630 = vadd.f32 %v566, 1.0
    %v631 = vadd.f32 %v567, 1.0
    %v632 = vadd.f32 %v568, 1.0
    %v633 = vadd.f32 %v569, 1.0
    %v634 = vadd.f32 %v570, 1.0
    %v635 = vadd.f32 %v571, 1.0
    %v636 = vadd.f32 %v572, 1.0
    %v637 = vadd.f32 %v573, 1.0
    %v638 = vadd.f32 %v574, 1.0
    %v639 = vadd.f32 %v575, 1.0
    %v640 = vadd.f32 %v576, 1.0
    %v641 = vadd.f32 %v577, 1.0
    %v642 = vadd.f32 %v578, 1.0
    %v643 = vadd.f32 %v579, 1.0
    %v644 = vadd.f32 %v580, 1.0
    %v645 = vadd.f32 %v581, 1.0
    %v646 = vadd.f32 %v582, 1.0
    %v647 = vadd.f32 %v583, 1.0
    %v648 = vadd.f32 %v584, 1.0
    %v649 = vadd.f32 %v585, 1.0
    %v650 = vadd.f32 %v586, 1.0
    %v651 = vmul.f32 %v395, %v587
    %v652 = vmul.f32 %v396, %v588
    %v653 = vmul.f32 %v397, %v589
    %v654 = vmul.f32 %v398, %v590
    %v655 = vmul.f32 %v399, %v591
    %v656 = vmul.f32 %v400, %v592
    %v657 = vmul.f32 %v401, %v593
    %v658 = vmul.f32 %v402, %v594
    %v659 = vmul.f32 %v403, %v595
    %v660 = vmul.f32 %v404, %v596
    %v661 = vmul.f32 %v405, %v597
    %v662 = vmul.f32 %v406, %v598
    %v663 = vmul.f32 %v407, %v599
    %v664 = vmul.f32 %v408, %v600
    %v665 = vmul.f32 %v409, %v601
    %v666 = vmul.f32 %v410, %v602
    %v667 = vmul.f32 %v411, %v603
    %v668 = vmul.f32 %v412, %v604
    %v669 = vmul.f32 %v413, %v605
    %v670 = vmul.f32 %v414, %v606
    %v671 = vmul.f32 %v415, %v607
    %v672 = vmul.f32 %v416, %v608
    %v673 = vmul.f32 %v417, %v609
    %v674 = vmul.f32 %v418, %v610
    %v675 = vmul.f32 %v419, %v611
    %v676 = vmul.f32 %v420, %v612
    %v677 = vmul.f32 %v421, %v613
    %v678 = vmul.f32 %v422, %v614
    %v679 = vmul.f32 %v423, %v615
    %v680 = vmul.f32 %v424, %v616
    %v681 = vmul.f32 %v425, %v617
    %v682 = vmul.f32 %v426, %v618
    %v683 = vmul.f32 %v427, %v619
    %v684 = vmul.f32 %v428, %v620
    %v685 = vmul.f32 %v429, %v621
    %v686 = vmul.f32 %v430, %v622
    %v687 = vmul.f32 %v431, %v623
    %v688 = vmul.f32 %v432, %v624
    %v689 = vmul.f32 %v433, %v625
    %v690 = vmul.f32 %v434, %v626
    %v691 = vmul.f32 %v435, %v627
    %v692 = vmul.f32 %v436, %v628
    %v693 = vmul.f32 %v437, %v629
    %v694 = vmul.f32 %v438, %v630
    %v695 = vmul.f32 %v439, %v631
    %v696 = vmul.f32 %v440, %v632
    %v697 = vmul.f32 %v441, %v633
    %v698 = vmul.f32 %v442, %v634
    %v699 = vmul.f32 %v443, %v635
    %v700 = vmul.f32 %v444, %v636
    %v701 = vmul.f32 %v445, %v637
    %v702 = vmul.f32 %v446, %v638
    %v703 = vmul.f32 %v447, %v639
    %v704 = vmul.f32 %v448, %v640
    %v705 = vmul.f32 %v449, %v641
    %v706 = vmul.f32 %v450, %v642
    %v707 = vmul.f32 %v451, %v643
    %v708 = vmul.f32 %v452, %v644
    %v709 = vmul.f32 %v453, %v645
    %v710 = vmul.f32 %v454, %v646
    %v711 = vmul.f32 %v455, %v647
    %v712 = vmul.f32 %v456, %v648
    %v713 = vmul.f32 %v457, %v649
    %v714 = vmul.f32 %v458, %v650
    %v715 = vld [vmem:[#allocation5] sm:$0xff]
    %v716 = vld [vmem:[#allocation5 + $0x8] sm:$0xff]
    %v717 = vld [vmem:[#allocation5 + $0x10] sm:$0xff]
    %v718 = vld [vmem:[#allocation5 + $0x18] sm:$0xff]
    %v719 = vld [vmem:[#allocation5 + $0x20] sm:$0xff]
    %v720 = vld [vmem:[#allocation5 + $0x28] sm:$0xff]
    %v721 = vld [vmem:[#allocation5 + $0x30] sm:$0xff]
    %v722 = vld [vmem:[#allocation5 + $0x38] sm:$0xff]
    %v723 = vld [vmem:[#allocation5 + $0x40] sm:$0xff]
    %v724 = vld [vmem:[#allocation5 + $0x48] sm:$0xff]
    %v725 = vld [vmem:[#allocation5 + $0x50] sm:$0xff]
    %v726 = vld [vmem:[#allocation5 + $0x58] sm:$0xff]
    %v727 = vld [vmem:[#allocation5 + $0x60] sm:$0xff]
    %v728 = vld [vmem:[#allocation5 + $0x68] sm:$0xff]
    %v729 = vld [vmem:[#allocation5 + $0x70] sm:$0xff]
    %v730 = vld [vmem:[#allocation5 + $0x78] sm:$0xff]
    %v731 = vld [vmem:[#allocation5 + $0x80] sm:$0xff]
    %v732 = vld [vmem:[#allocation5 + $0x88] sm:$0xff]
    %v733 = vld [vmem:[#allocation5 + $0x90] sm:$0xff]
    %v734 = vld [vmem:[#allocation5 + $0x98] sm:$0xff]
    %v735 = vld [vmem:[#allocation5 + $0xa0] sm:$0xff]
    %v736 = vld [vmem:[#allocation5 + $0xa8] sm:$0xff]
    %v737 = vld [vmem:[#allocation5 + $0xb0] sm:$0xff]
    %v738 = vld [vmem:[#allocation5 + $0xb8] sm:$0xff]
    %v739 = vld [vmem:[#allocation5 + $0xc0] sm:$0xff]
    %v740 = vld [vmem:[#allocation5 + $0xc8] sm:$0xff]
    %v741 = vld [vmem:[#allocation5 + $0xd0] sm:$0xff]
    %v742 = vld [vmem:[#allocation5 + $0xd8] sm:$0xff]
    %v743 = vld [vmem:[#allocation5 + $0xe0] sm:$0xff]
    %v744 = vld [vmem:[#allocation5 + $0xe8] sm:$0xff]
    %v745 = vld [vmem:[#allocation5 + $0xf0] sm:$0xff]
    %v746 = vld [vmem:[#allocation5 + $0xf8] sm:$0xff]
    %v747 = vld [vmem:[%s3] sm:$0x3]
    %v749 = vlaneseq
    %v750 = vshrl.u32 %v749, 7
    %v751 = vsub.s32 0, %v750
    %v752 = vrot.slane %v747, %v751
    %v753 = vlaneseq
    %v754 = vshrl.u32 %v753, 7
    %v755 = vsub.s32 1, %v754
    %v756 = vrot.slane %v747, %v755
    %759 = vmatprep.subr.mxu0 %v716
    %760 = vmatpush1.msra.mxu0 %v715
    %761 = vmatprep.subr.mxu0 %v718
    %762 = vmatpush1.msra.mxu0 %v717
    %763 = vmatprep.subr.mxu0 %v720
    %764 = vmatpush1.msra.mxu0 %v719
    %765 = vmatprep.subr.mxu0 %v722
    %766 = vmatpush1.msra.mxu0 %v721
    %767 = vmatprep.subr.mxu0 %v724
    %768 = vmatpush1.msra.mxu0 %v723
    %769 = vmatprep.subr.mxu0 %v726
    %770 = vmatpush1.msra.mxu0 %v725
    %771 = vmatprep.subr.mxu0 %v728
    %772 = vmatpush1.msra.mxu0 %v727
    %773 = vmatprep.subr.mxu0 %v730
    %774 = vmatpush1.msra.mxu0 %v729
    %775 = vmatprep.subr.mxu0 %v732
    %776 = vmatpush1.msra.mxu0 %v731
    %777 = vmatprep.subr.mxu0 %v734
    %778 = vmatpush1.msra.mxu0 %v733
    %779 = vmatprep.subr.mxu0 %v736
    %780 = vmatpush1.msra.mxu0 %v735
    %781 = vmatprep.subr.mxu0 %v738
    %782 = vmatpush1.msra.mxu0 %v737
    %783 = vmatprep.subr.mxu0 %v740
    %784 = vmatpush1.msra.mxu0 %v739
    %785 = vmatprep.subr.mxu0 %v742
    %786 = vmatpush1.msra.mxu0 %v741
    %787 = vmatprep.subr.mxu0 %v744
    %788 = vmatpush1.msra.mxu0 %v743
    %789 = vmatprep.subr.mxu0 %v746
    %790 = vmatpush1.msra.mxu0 %v745
    %791 = vmatprep.subr.mxu0 0.0
    %792 = vmatpush1.msra.mxu0 0.0
    %793 = vmatprep.subr.mxu0 0.0
    %794 = vmatpush1.msra.mxu0 0.0
    %795 = vmatprep.subr.mxu0 0.0
    %796 = vmatpush1.msra.mxu0 0.0
    %797 = vmatprep.subr.mxu0 0.0
    %798 = vmatpush1.msra.mxu0 0.0
    %799 = vmatprep.subr.mxu0 0.0
    %800 = vmatpush1.msra.mxu0 0.0
    %801 = vmatprep.subr.mxu0 0.0
    %802 = vmatpush1.msra.mxu0 0.0
    %803 = vmatprep.subr.mxu0 0.0
    %804 = vmatpush1.msra.mxu0 0.0
    %805 = vmatprep.subr.mxu0 0.0
    %806 = vmatpush1.msra.mxu0 0.0
    %807 = vmatprep.subr.mxu0 0.0
    %808 = vmatpush1.msra.mxu0 0.0
    %809 = vmatprep.subr.mxu0 0.0
    %810 = vmatpush1.msra.mxu0 0.0
    %811 = vmatprep.subr.mxu0 0.0
    %812 = vmatpush1.msra.mxu0 0.0
    %813 = vmatprep.subr.mxu0 0.0
    %814 = vmatpush1.msra.mxu0 0.0
    %815 = vmatprep.subr.mxu0 0.0
    %816 = vmatpush1.msra.mxu0 0.0
    %817 = vmatprep.subr.mxu0 0.0
    %818 = vmatpush1.msra.mxu0 0.0
    %819 = vmatprep.subr.mxu0 0.0
    %820 = vmatpush1.msra.mxu0 0.0
    %821 = vmatprep.subr.mxu0 0.0
    %822 = vmatpush1.msra.mxu0 0.0
    %823 = vmatprep.mubr.f32.mxu0 0.0
    %824 = vmatmul.mubr.f32.gmra.mrb[0].mxu0 %v62
    %v825 = vpop.f32.mrb[0].mxu0
    %v826 = vadd.f32 %v752, %v825
    %v827 = vpop.f32.mrb[0].mxu0
    %v828 = vadd.f32 %v756, %v827
    %829 = vmatprep.mubr.f32.mxu0 0.0
    %830 = vmatmul.mubr.f32.gmra.mrb[0].mxu0 %v63
    %v831 = vpop.f32.mrb[0].mxu0
    %v832 = vadd.f32 %v752, %v831
    %v833 = vpop.f32.mrb[0].mxu0
    %v834 = vadd.f32 %v756, %v833
    %835 = vmatprep.mubr.f32.mxu0 0.0
    %836 = vmatmul.mubr.f32.gmra.mrb[0].mxu0 %v64
    %v837 = vpop.f32.mrb[0].mxu0
    %v838 = vadd.f32 %v752, %v837
    %v839 = vpop.f32.mrb[0].mxu0
    %v840 = vadd.f32 %v756, %v839
    %841 = vmatprep.mubr.f32.mxu0 0.0
    %842 = vmatmul.mubr.f32.gmra.mrb[0].mxu0 %v65
    %v843 = vpop.f32.mrb[0].mxu0
    %v844 = vadd.f32 %v752, %v843
    %v845 = vpop.f32.mrb[0].mxu0
    %v846 = vadd.f32 %v756, %v845
    %847 = vmatprep.mubr.f32.mxu0 0.0
    %848 = vmatmul.mubr.f32.gmra.mrb[0].mxu0 %v66
    %v849 = vpop.f32.mrb[0].mxu0
    %v850 = vadd.f32 %v752, %v849
    %v851 = vpop.f32.mrb[0].mxu0
    %v852 = vadd.f32 %v756, %v851
    %853 = vmatprep.mubr.f32.mxu0 0.0
    %854 = vmatmul.mubr.f32.gmra.mrb[0].mxu0 %v67
    %v855 = vpop.f32.mrb[0].mxu0
    %v856 = vadd.f32 %v752, %v855
    %v857 = vpop.f32.mrb[0].mxu0
    %v858 = vadd.f32 %v756, %v857
    %859 = vmatprep.mubr.f32.mxu0 0.0
    %860 = vmatmul.mubr.f32.gmra.mrb[0].mxu0 %v68
    %v861 = vpop.f32.mrb[0].mxu0
    %v862 = vadd.f32 %v752, %v861
    %v863 = vpop.f32.mrb[0].mxu0
    %v864 = vadd.f32 %v756, %v863
    %865 = vmatprep.mubr.f32.mxu0 0.0
    %866 = vmatmul.mubr.f32.gmra.mrb[0].mxu0 %v69
    %v867 = vpop.f32.mrb[0].mxu0
    %v868 = vadd.f32 %v752, %v867
    %v869 = vpop.f32.mrb[0].mxu0
    %v870 = vadd.f32 %v756, %v869
    %871 = vmatprep.mubr.f32.mxu0 0.0
    %872 = vmatmul.mubr.f32.gmra.mrb[0].mxu0 %v70
    %v873 = vpop.f32.mrb[0].mxu0
    %v874 = vadd.f32 %v752, %v873
    %v875 = vpop.f32.mrb[0].mxu0
    %v876 = vadd.f32 %v756, %v875
    %877 = vmatprep.mubr.f32.mxu0 0.0
    %878 = vmatmul.mubr.f32.gmra.mrb[0].mxu0 %v71
    %v879 = vpop.f32.mrb[0].mxu0
    %v880 = vadd.f32 %v752, %v879
    %v881 = vpop.f32.mrb[0].mxu0
    %v882 = vadd.f32 %v756, %v881
    %883 = vmatprep.mubr.f32.mxu0 0.0
    %884 = vmatmul.mubr.f32.gmra.mrb[0].mxu0 %v72
    %v885 = vpop.f32.mrb[0].mxu0
    %v886 = vadd.f32 %v752, %v885
    %v887 = vpop.f32.mrb[0].mxu0
    %v888 = vadd.f32 %v756, %v887
    %889 = vmatprep.mubr.f32.mxu0 0.0
    %890 = vmatmul.mubr.f32.gmra.mrb[0].mxu0 %v73
    %v891 = vpop.f32.mrb[0].mxu0
    %v892 = vadd.f32 %v752, %v891
    %v893 = vpop.f32.mrb[0].mxu0
    %v894 = vadd.f32 %v756, %v893
    %895 = vmatprep.mubr.f32.mxu0 0.0
    %896 = vmatmul.mubr.f32.gmra.mrb[0].mxu0 %v74
    %v897 = vpop.f32.mrb[0].mxu0
    %v898 = vadd.f32 %v752, %v897
    %v899 = vpop.f32.mrb[0].mxu0
    %v900 = vadd.f32 %v756, %v899
    %901 = vmatprep.mubr.f32.mxu0 0.0
    %902 = vmatmul.mubr.f32.gmra.mrb[0].mxu0 %v75
    %v903 = vpop.f32.mrb[0].mxu0
    %v904 = vadd.f32 %v752, %v903
    %v905 = vpop.f32.mrb[0].mxu0
    %v906 = vadd.f32 %v756, %v905
    %907 = vmatprep.mubr.f32.mxu0 0.0
    %908 = vmatmul.mubr.f32.gmra.mrb[0].mxu0 %v76
    %v909 = vpop.f32.mrb[0].mxu0
    %v910 = vadd.f32 %v752, %v909
    %v911 = vpop.f32.mrb[0].mxu0
    %v912 = vadd.f32 %v756, %v911
    %913 = vmatprep.mubr.f32.mxu0 0.0
    %914 = vmatmul.mubr.f32.gmra.mrb[0].mxu0 %v77
    %v915 = vpop.f32.mrb[0].mxu0
    %v916 = vadd.f32 %v752, %v915
    %v917 = vpop.f32.mrb[0].mxu0
    %v918 = vadd.f32 %v756, %v917
    %919 = vmatprep.mubr.f32.mxu0 0.0
    %920 = vmatmul.mubr.f32.gmra.mrb[0].mxu0 %v78
    %v921 = vpop.f32.mrb[0].mxu0
    %v922 = vadd.f32 %v752, %v921
    %v923 = vpop.f32.mrb[0].mxu0
    %v924 = vadd.f32 %v756, %v923
    %925 = vmatprep.mubr.f32.mxu0 0.0
    %926 = vmatmul.mubr.f32.gmra.mrb[0].mxu0 %v79
    %v927 = vpop.f32.mrb[0].mxu0
    %v928 = vadd.f32 %v752, %v927
    %v929 = vpop.f32.mrb[0].mxu0
    %v930 = vadd.f32 %v756, %v929
    %931 = vmatprep.mubr.f32.mxu0 0.0
    %932 = vmatmul.mubr.f32.gmra.mrb[0].mxu0 %v80
    %v933 = vpop.f32.mrb[0].mxu0
    %v934 = vadd.f32 %v752, %v933
    %v935 = vpop.f32.mrb[0].mxu0
    %v936 = vadd.f32 %v756, %v935
    %937 = vmatprep.mubr.f32.mxu0 0.0
    %938 = vmatmul.mubr.f32.gmra.mrb[0].mxu0 %v81
    %v939 = vpop.f32.mrb[0].mxu0
    %v940 = vadd.f32 %v752, %v939
    %v941 = vpop.f32.mrb[0].mxu0
    %v942 = vadd.f32 %v756, %v941
    %943 = vmatprep.mubr.f32.mxu0 0.0
    %944 = vmatmul.mubr.f32.gmra.mrb[0].mxu0 %v82
    %v945 = vpop.f32.mrb[0].mxu0
    %v946 = vadd.f32 %v752, %v945
    %v947 = vpop.f32.mrb[0].mxu0
    %v948 = vadd.f32 %v756, %v947
    %949 = vmatprep.mubr.f32.mxu0 0.0
    %950 = vmatmul.mubr.f32.gmra.mrb[0].mxu0 %v83
    %v951 = vpop.f32.mrb[0].mxu0
    %v952 = vadd.f32 %v752, %v951
    %v953 = vpop.f32.mrb[0].mxu0
    %v954 = vadd.f32 %v756, %v953
    %955 = vmatprep.mubr.f32.mxu0 0.0
    %956 = vmatmul.mubr.f32.gmra.mrb[0].mxu0 %v84
    %v957 = vpop.f32.mrb[0].mxu0
    %v958 = vadd.f32 %v752, %v957
    %v959 = vpop.f32.mrb[0].mxu0
    %v960 = vadd.f32 %v756, %v959
    %961 = vmatprep.mubr.f32.mxu0 0.0
    %962 = vmatmul.mubr.f32.gmra.mrb[0].mxu0 %v85
    %v963 = vpop.f32.mrb[0].mxu0
    %v964 = vadd.f32 %v752, %v963
    %v965 = vpop.f32.mrb[0].mxu0
    %v966 = vadd.f32 %v756, %v965
    %967 = vmatprep.mubr.f32.mxu0 0.0
    %968 = vmatmul.mubr.f32.gmra.mrb[0].mxu0 %v86
    %v969 = vpop.f32.mrb[0].mxu0
    %v970 = vadd.f32 %v752, %v969
    %v971 = vpop.f32.mrb[0].mxu0
    %v972 = vadd.f32 %v756, %v971
    %973 = vmatprep.mubr.f32.mxu0 0.0
    %974 = vmatmul.mubr.f32.gmra.mrb[0].mxu0 %v87
    %v975 = vpop.f32.mrb[0].mxu0
    %v976 = vadd.f32 %v752, %v975
    %v977 = vpop.f32.mrb[0].mxu0
    %v978 = vadd.f32 %v756, %v977
    %979 = vmatprep.mubr.f32.mxu0 0.0
    %980 = vmatmul.mubr.f32.gmra.mrb[0].mxu0 %v88
    %v981 = vpop.f32.mrb[0].mxu0
    %v982 = vadd.f32 %v752, %v981
    %v983 = vpop.f32.mrb[0].mxu0
    %v984 = vadd.f32 %v756, %v983
    %985 = vmatprep.mubr.f32.mxu0 0.0
    %986 = vmatmul.mubr.f32.gmra.mrb[0].mxu0 %v89
    %v987 = vpop.f32.mrb[0].mxu0
    %v988 = vadd.f32 %v752, %v987
    %v989 = vpop.f32.mrb[0].mxu0
    %v990 = vadd.f32 %v756, %v989
    %991 = vmatprep.mubr.f32.mxu0 0.0
    %992 = vmatmul.mubr.f32.gmra.mrb[0].mxu0 %v90
    %v993 = vpop.f32.mrb[0].mxu0
    %v994 = vadd.f32 %v752, %v993
    %v995 = vpop.f32.mrb[0].mxu0
    %v996 = vadd.f32 %v756, %v995
    %997 = vmatprep.mubr.f32.mxu0 0.0
    %998 = vmatmul.mubr.f32.gmra.mrb[0].mxu0 %v91
    %v999 = vpop.f32.mrb[0].mxu0
    %v1000 = vadd.f32 %v752, %v999
    %v1001 = vpop.f32.mrb[0].mxu0
    %v1002 = vadd.f32 %v756, %v1001
    %1003 = vmatprep.mubr.f32.mxu0 0.0
    %1004 = vmatmul.mubr.f32.gmra.mrb[0].mxu0 %v92
    %v1005 = vpop.f32.mrb[0].mxu0
    %v1006 = vadd.f32 %v752, %v1005
    %v1007 = vpop.f32.mrb[0].mxu0
    %v1008 = vadd.f32 %v756, %v1007
    %1009 = vmatprep.mubr.f32.mxu0 0.0
    %1010 = vmatmul.mubr.f32.gmra.mrb[0].mxu0 %v93
    %v1011 = vpop.f32.mrb[0].mxu0
    %v1012 = vadd.f32 %v752, %v1011
    %v1013 = vpop.f32.mrb[0].mxu0
    %v1014 = vadd.f32 %v756, %v1013
    %1015 = vdwg.mxu0
    %v1016 = vmul.f32 %v826, %v651
    %v1017 = vmul.f32 %v828, %v652
    %v1018 = vmul.f32 %v832, %v653
    %v1019 = vmul.f32 %v834, %v654
    %v1020 = vmul.f32 %v838, %v655
    %v1021 = vmul.f32 %v840, %v656
    %v1022 = vmul.f32 %v844, %v657
    %v1023 = vmul.f32 %v846, %v658
    %v1024 = vmul.f32 %v850, %v659
    %v1025 = vmul.f32 %v852, %v660
    %v1026 = vmul.f32 %v856, %v661
    %v1027 = vmul.f32 %v858, %v662
    %v1028 = vmul.f32 %v862, %v663
    %v1029 = vmul.f32 %v864, %v664
    %v1030 = vmul.f32 %v868, %v665
    %v1031 = vmul.f32 %v870, %v666
    %v1032 = vmul.f32 %v874, %v667
    %v1033 = vmul.f32 %v876, %v668
    %v1034 = vmul.f32 %v880, %v669
    %v1035 = vmul.f32 %v882, %v670
    %v1036 = vmul.f32 %v886, %v671
    %v1037 = vmul.f32 %v888, %v672
    %v1038 = vmul.f32 %v892, %v673
    %v1039 = vmul.f32 %v894, %v674
    %v1040 = vmul.f32 %v898, %v675
    %v1041 = vmul.f32 %v900, %v676
    %v1042 = vmul.f32 %v904, %v677
    %v1043 = vmul.f32 %v906, %v678
    %v1044 = vmul.f32 %v910, %v679
    %v1045 = vmul.f32 %v912, %v680
    %v1046 = vmul.f32 %v916, %v681
    %v1047 = vmul.f32 %v918, %v682
    %v1048 = vmul.f32 %v922, %v683
    %v1049 = vmul.f32 %v924, %v684
    %v1050 = vmul.f32 %v928, %v685
    %v1051 = vmul.f32 %v930, %v686
    %v1052 = vmul.f32 %v934, %v687
    %v1053 = vmul.f32 %v936, %v688
    %v1054 = vmul.f32 %v940, %v689
    %v1055 = vmul.f32 %v942, %v690
    %v1056 = vmul.f32 %v946, %v691
    %v1057 = vmul.f32 %v948, %v692
    %v1058 = vmul.f32 %v952, %v693
    %v1059 = vmul.f32 %v954, %v694
    %v1060 = vmul.f32 %v958, %v695
    %v1061 = vmul.f32 %v960, %v696
    %v1062 = vmul.f32 %v964, %v697
    %v1063 = vmul.f32 %v966, %v698
    %v1064 = vmul.f32 %v970, %v699
    %v1065 = vmul.f32 %v972, %v700
    %v1066 = vmul.f32 %v976, %v701
    %v1067 = vmul.f32 %v978, %v702
    %v1068 = vmul.f32 %v982, %v703
    %v1069 = vmul.f32 %v984, %v704
    %v1070 = vmul.f32 %v988, %v705
    %v1071 = vmul.f32 %v990, %v706
    %v1072 = vmul.f32 %v994, %v707
    %v1073 = vmul.f32 %v996, %v708
    %v1074 = vmul.f32 %v1000, %v709
    %v1075 = vmul.f32 %v1002, %v710
    %v1076 = vmul.f32 %v1006, %v711
    %v1077 = vmul.f32 %v1008, %v712
    %v1078 = vmul.f32 %v1012, %v713
    %v1079 = vmul.f32 %v1014, %v714
    %1080 = vst [vmem:[#allocation8] sm:$0xff] %v1016
    %1081 = vst [vmem:[#allocation8 + $0x8] sm:$0xff] %v1017
    %1082 = vst [vmem:[#allocation8 + $0x10] sm:$0xff] %v1018
    %1083 = vst [vmem:[#allocation8 + $0x18] sm:$0xff] %v1019
    %1084 = vst [vmem:[#allocation8 + $0x20] sm:$0xff] %v1020
    %1085 = vst [vmem:[#allocation8 + $0x28] sm:$0xff] %v1021
    %1086 = vst [vmem:[#allocation8 + $0x30] sm:$0xff] %v1022
    %1087 = vst [vmem:[#allocation8 + $0x38] sm:$0xff] %v1023
    %1088 = vst [vmem:[#allocation8 + $0x40] sm:$0xff] %v1024
    %1089 = vst [vmem:[#allocation8 + $0x48] sm:$0xff] %v1025
    %1090 = vst [vmem:[#allocation8 + $0x50] sm:$0xff] %v1026
    %1091 = vst [vmem:[#allocation8 + $0x58] sm:$0xff] %v1027
    %1092 = vst [vmem:[#allocation8 + $0x60] sm:$0xff] %v1028
    %1093 = vst [vmem:[#allocation8 + $0x68] sm:$0xff] %v1029
    %1094 = vst [vmem:[#allocation8 + $0x70] sm:$0xff] %v1030
    %1095 = vst [vmem:[#allocation8 + $0x78] sm:$0xff] %v1031
    %1096 = vst [vmem:[#allocation8 + $0x80] sm:$0xff] %v1032
    %1097 = vst [vmem:[#allocation8 + $0x88] sm:$0xff] %v1033
    %1098 = vst [vmem:[#allocation8 + $0x90] sm:$0xff] %v1034
    %1099 = vst [vmem:[#allocation8 + $0x98] sm:$0xff] %v1035
    %1100 = vst [vmem:[#allocation8 + $0xa0] sm:$0xff] %v1036
    %1101 = vst [vmem:[#allocation8 + $0xa8] sm:$0xff] %v1037
    %1102 = vst [vmem:[#allocation8 + $0xb0] sm:$0xff] %v1038
    %1103 = vst [vmem:[#allocation8 + $0xb8] sm:$0xff] %v1039
    %1104 = vst [vmem:[#allocation8 + $0xc0] sm:$0xff] %v1040
    %1105 = vst [vmem:[#allocation8 + $0xc8] sm:$0xff] %v1041
    %1106 = vst [vmem:[#allocation8 + $0xd0] sm:$0xff] %v1042
    %1107 = vst [vmem:[#allocation8 + $0xd8] sm:$0xff] %v1043
    %1108 = vst [vmem:[#allocation8 + $0xe0] sm:$0xff] %v1044
    %1109 = vst [vmem:[#allocation8 + $0xe8] sm:$0xff] %v1045
    %1110 = vst [vmem:[#allocation8 + $0xf0] sm:$0xff] %v1046
    %1111 = vst [vmem:[#allocation8 + $0xf8] sm:$0xff] %v1047
    %1112 = vst [vmem:[#allocation8 + $0x100] sm:$0xff] %v1048
    %1113 = vst [vmem:[#allocation8 + $0x108] sm:$0xff] %v1049
    %1114 = vst [vmem:[#allocation8 + $0x110] sm:$0xff] %v1050
    %1115 = vst [vmem:[#allocation8 + $0x118] sm:$0xff] %v1051
    %1116 = vst [vmem:[#allocation8 + $0x120] sm:$0xff] %v1052
    %1117 = vst [vmem:[#allocation8 + $0x128] sm:$0xff] %v1053
    %1118 = vst [vmem:[#allocation8 + $0x130] sm:$0xff] %v1054
    %1119 = vst [vmem:[#allocation8 + $0x138] sm:$0xff] %v1055
    %1120 = vst [vmem:[#allocation8 + $0x140] sm:$0xff] %v1056
    %1121 = vst [vmem:[#allocation8 + $0x148] sm:$0xff] %v1057
    %1122 = vst [vmem:[#allocation8 + $0x150] sm:$0xff] %v1058
    %1123 = vst [vmem:[#allocation8 + $0x158] sm:$0xff] %v1059
    %1124 = vst [vmem:[#allocation8 + $0x160] sm:$0xff] %v1060
    %1125 = vst [vmem:[#allocation8 + $0x168] sm:$0xff] %v1061
    %1126 = vst [vmem:[#allocation8 + $0x170] sm:$0xff] %v1062
    %1127 = vst [vmem:[#allocation8 + $0x178] sm:$0xff] %v1063
    %1128 = vst [vmem:[#allocation8 + $0x180] sm:$0xff] %v1064
    %1129 = vst [vmem:[#allocation8 + $0x188] sm:$0xff] %v1065
    %1130 = vst [vmem:[#allocation8 + $0x190] sm:$0xff] %v1066
    %1131 = vst [vmem:[#allocation8 + $0x198] sm:$0xff] %v1067
    %1132 = vst [vmem:[#allocation8 + $0x1a0] sm:$0xff] %v1068
    %1133 = vst [vmem:[#allocation8 + $0x1a8] sm:$0xff] %v1069
    %1134 = vst [vmem:[#allocation8 + $0x1b0] sm:$0xff] %v1070
    %1135 = vst [vmem:[#allocation8 + $0x1b8] sm:$0xff] %v1071
    %1136 = vst [vmem:[#allocation8 + $0x1c0] sm:$0xff] %v1072
    %1137 = vst [vmem:[#allocation8 + $0x1c8] sm:$0xff] %v1073
    %1138 = vst [vmem:[#allocation8 + $0x1d0] sm:$0xff] %v1074
    %1139 = vst [vmem:[#allocation8 + $0x1d8] sm:$0xff] %v1075
    %1140 = vst [vmem:[#allocation8 + $0x1e0] sm:$0xff] %v1076
    %1141 = vst [vmem:[#allocation8 + $0x1e8] sm:$0xff] %v1077
    %1142 = vst [vmem:[#allocation8 + $0x1f0] sm:$0xff] %v1078
    %1143 = vst [vmem:[#allocation8 + $0x1f8] sm:$0xff] %v1079
    // Predicated region
    $region34: #{tpu_custom_call.1} parent=1 // pred_check
      _
    $region35: #{tpu_custom_call.1} parent=1 // pred_check_branch
      %1145 = sbr.rel (0) target = $region37
    $region36: #{tpu_custom_call.1} parent=1 // pred_region
      %s1147 = ssub.s32 8192, 8192
      %1148 = vsyncadd [#allocation4], %s1147
      %s1149 = sshll.u32 [#allocation8], 4
      %s1150 = int_to_ptr.vmem [resolvable:$true] %s1149
      %1155 = dma.vmem_to_hbm [thread:$0]  %s1150, 8192, %s5, [#allocation4], 256, 256, 16
    $region37: #{tpu_custom_call.1} parent=1 // pred_fallthru
      _
    // Predicated region
    $region38: #{tpu_custom_call.1} parent=1 // pred_check
      _
    $region39: #{tpu_custom_call.1} parent=1 // pred_check_branch
      %1157 = sbr.rel (0) target = $region41
    $region40: #{tpu_custom_call.1} parent=1 // pred_region
      %1158 = dma.done [#allocation4], 8192
    $region41: #{tpu_custom_call.1} parent=1 // pred_fallthru
      _
    %1159 = vsyncpa [#allocation3], 1
    %1160 = vsyncpa [#allocation6], 1
    %1161 = vsyncpa [#allocation4], 1

// kernel: tpu_custom_call.1
$region0: #{tpu_custom_call.1}
  #allocation0 [shape = 'u32[]', space=smem, size = 0x4, offset = 0x4, fixed_abs, tag = 'smem constant byte address 0x4 - core index']
  #allocation1 [shape = 'u32[144,128]{1,0:T(1,128)}', space=vmem, size = 0x12000, scoped, tag = 'internal scratch']
  %s0 = inlined_call_operand.hbm [shape: f32[256,128], index: 0, kind: input, shape index: {}]
  %s1 = inlined_call_operand.hbm [shape: f32[128,256], index: 1, kind: input, shape index: {}]
  %s2 = inlined_call_operand.hbm [shape: f32[128,256], index: 2, kind: input, shape index: {}]
  %s3 = inlined_call_operand.vmem [shape: f32[1,256], index: 3, kind: input, shape index: {}]
  %s4 = inlined_call_operand.vmem [shape: f32[1,256], index: 4, kind: input, shape index: {}]
  %s5 = inlined_call_operand.hbm [shape: f32[256,256], index: 5, kind: output, shape index: {}]
  %s6 = sld [smem:[#allocation0]]
  $region42: #{tpu_custom_call.1} parent=0
    _
  %s8 = ssub.s32 1, %s6
  %s9 = scalar_select 0, %s8, %s6
  $region1: #{tpu_custom_call.1} parent=0
    #allocation2 [shape = 'u8[131072]{0}', space=vmem, size = 0x20000, scoped, tag = 'input window, operand 0, single buffered']
    #allocation3 [shape = 's32[1]{0}', space=sflag, size = 0x4, scoped, tag = 'scoped memory for tpu_custom_call.1']
    #allocation4 [shape = 's32[1]{0}', space=sflag, size = 0x4, scoped, tag = 'scoped memory for tpu_custom_call.1']
    #allocation5 [shape = 'u8[131072]{0}', space=vmem, size = 0x20000, scoped, tag = 'input window, operand 1, single buffered']
    #allocation6 [shape = 's32[1]{0}', space=sflag, size = 0x4, scoped, tag = 'scoped memory for tpu_custom_call.1']
    #allocation7 [shape = 'u8[131072]{0}', space=vmem, size = 0x20000, scoped, tag = 'input window, operand 2, single buffered']
    #allocation8 [shape = 'u8[262144]{0}', space=vmem, size = 0x40000, scoped, tag = 'output window, operand 0, single buffered']
    %10 = vsyncpa [#allocation3], 0
    %11 = vsyncpa [#allocation6], 0
    %12 = vsyncpa [#allocation4], 0
    // Predicated region
    $region2: #{tpu_custom_call.1} parent=1 // pred_check
      _
    $region3: #{tpu_custom_call.1} parent=1 // pred_check_branch
      %14 = sbr.rel (0) target = $region5
    $region4: #{tpu_custom_call.1} parent=1 // pred_region
      %s16 = ssub.s32 4096, 4096
      %17 = vsyncadd [#allocation3], %s16
      %s18 = sshll.u32 [#allocation2], 4
      %s19 = int_to_ptr.vmem [resolvable:$true] %s18
      %24 = dma.hbm_to_vmem [thread:$0]  %s0, 4096, %s19, [#allocation3], 128, 128, 8
    $region5: #{tpu_custom_call.1} parent=1 // pred_fallthru
      _
    // Predicated region
    $region6: #{tpu_custom_call.1} parent=1 // pred_check
      _
    $region7: #{tpu_custom_call.1} parent=1 // pred_check_branch
      %26 = sbr.rel (0) target = $region9
    $region8: #{tpu_custom_call.1} parent=1 // pred_region
      %s28 = ssub.s32 4096, 4096
      %29 = vsyncadd [#allocation6], %s28
      %s30 = sshll.u32 [#allocation5], 4
      %s31 = int_to_ptr.vmem [resolvable:$true] %s30
      %36 = dma.hbm_to_vmem [thread:$0]  %s1, 4096, %s31, [#allocation6], 256, 256, 16
    $region9: #{tpu_custom_call.1} parent=1 // pred_fallthru
      _
    // Predicated region
    $region10: #{tpu_custom_call.1} parent=1 // pred_check
      _
    $region11: #{tpu_custom_call.1} parent=1 // pred_check_branch
      %38 = sbr.rel (0) target = $region13
    $region12: #{tpu_custom_call.1} parent=1 // pred_region
      %s40 = ssub.s32 4096, 4096
      %41 = vsyncadd [#allocation6], %s40
      %s42 = sshll.u32 [#allocation7], 4
      %s43 = int_to_ptr.vmem [resolvable:$true] %s42
      %48 = dma.hbm_to_vmem [thread:$0]  %s2, 4096, %s43, [#allocation6], 256, 256, 16
    $region13: #{tpu_custom_call.1} parent=1 // pred_fallthru
      _
    // Predicated region
    $region14: #{tpu_custom_call.1} parent=1 // pred_check
      _
    $region15: #{tpu_custom_call.1} parent=1 // pred_check_branch
      %50 = sbr.rel (0) target = $region17
    $region16: #{tpu_custom_call.1} parent=1 // pred_region
      _
    $region17: #{tpu_custom_call.1} parent=1 // pred_fallthru
      _
    // Predicated region
    $region18: #{tpu_custom_call.1} parent=1 // pred_check
      _
    $region19: #{tpu_custom_call.1} parent=1 // pred_check_branch
      %52 = sbr.rel (0) target = $region21
    $region20: #{tpu_custom_call.1} parent=1 // pred_region
      _
    $region21: #{tpu_custom_call.1} parent=1 // pred_fallthru
      _
    // Predicated region
    $region22: #{tpu_custom_call.1} parent=1 // pred_check
      _
    $region23: #{tpu_custom_call.1} parent=1 // pred_check_branch
      %54 = sbr.rel (0) target = $region25
    $region24: #{tpu_custom_call.1} parent=1 // pred_region
      %55 = dma.done [#allocation3], 4096
    $region25: #{tpu_custom_call.1} parent=1 // pred_fallthru
      _
    // Predicated region
    $region26: #{tpu_custom_call.1} parent=1 // pred_check
      _
    $region27: #{tpu_custom_call.1} parent=1 // pred_check_branch
      %57 = sbr.rel (0) target = $region29
    $region28: #{tpu_custom_call.1} parent=1 // pred_region
      %58 = dma.done [#allocation6], 4096
    $region29: #{tpu_custom_call.1} parent=1 // pred_fallthru
      _
    // Predicated region
    $region30: #{tpu_custom_call.1} parent=1 // pred_check
      _
    $region31: #{tpu_custom_call.1} parent=1 // pred_check_branch
      %60 = sbr.rel (0) target = $region33
    $region32: #{tpu_custom_call.1} parent=1 // pred_region
      %61 = dma.done [#allocation6], 4096
    $region33: #{tpu_custom_call.1} parent=1 // pred_fallthru
      _
    %v62 = vld [vmem:[#allocation2] sm:$0xff]
    %v63 = vld [vmem:[#allocation2 + $0x8] sm:$0xff]
    %v64 = vld [vmem:[#allocation2 + $0x10] sm:$0xff]
    %v65 = vld [vmem:[#allocation2 + $0x18] sm:$0xff]
    %v66 = vld [vmem:[#allocation2 + $0x20] sm:$0xff]
    %v67 = vld [vmem:[#allocation2 + $0x28] sm:$0xff]
    %v68 = vld [vmem:[#allocation2 + $0x30] sm:$0xff]
    %v69 = vld [vmem:[#allocation2 + $0x38] sm:$0xff]
    %v70 = vld [vmem:[#allocation2 + $0x40] sm:$0xff]
    %v71 = vld [vmem:[#allocation2 + $0x48] sm:$0xff]
    %v72 = vld [vmem:[#allocation2 + $0x50] sm:$0xff]
    %v73 = vld [vmem:[#allocation2 + $0x58] sm:$0xff]
    %v74 = vld [vmem:[#allocation2 + $0x60] sm:$0xff]
    %v75 = vld [vmem:[#allocation2 + $0x68] sm:$0xff]
    %v76 = vld [vmem:[#allocation2 + $0x70] sm:$0xff]
    %v77 = vld [vmem:[#allocation2 + $0x78] sm:$0xff]
    %v78 = vld [vmem:[#allocation2 + $0x80] sm:$0xff]
    %v79 = vld [vmem:[#allocation2 + $0x88] sm:$0xff]
    %v80 = vld [vmem:[#allocation2 + $0x90] sm:$0xff]
    %v81 = vld [vmem:[#allocation2 + $0x98] sm:$0xff]
    %v82 = vld [vmem:[#allocation2 + $0xa0] sm:$0xff]
    %v83 = vld [vmem:[#allocation2 + $0xa8] sm:$0xff]
    %v84 = vld [vmem:[#allocation2 + $0xb0] sm:$0xff]
    %v85 = vld [vmem:[#allocation2 + $0xb8] sm:$0xff]
    %v86 = vld [vmem:[#allocation2 + $0xc0] sm:$0xff]
    %v87 = vld [vmem:[#allocation2 + $0xc8] sm:$0xff]
    %v88 = vld [vmem:[#allocation2 + $0xd0] sm:$0xff]
    %v89 = vld [vmem:[#allocation2 + $0xd8] sm:$0xff]
    %v90 = vld [vmem:[#allocation2 + $0xe0] sm:$0xff]
    %v91 = vld [vmem:[#allocation2 + $0xe8] sm:$0xff]
    %v92 = vld [vmem:[#allocation2 + $0xf0] sm:$0xff]
    %v93 = vld [vmem:[#allocation2 + $0xf8] sm:$0xff]
    %v94 = vld [vmem:[#allocation7] sm:$0xff]
    %v95 = vld [vmem:[#allocation7 + $0x8] sm:$0xff]
    %v96 = vld [vmem:[#allocation7 + $0x10] sm:$0xff]
    %v97 = vld [vmem:[#allocation7 + $0x18] sm:$0xff]
    %v98 = vld [vmem:[#allocation7 + $0x20] sm:$0xff]
    %v99 = vld [vmem:[#allocation7 + $0x28] sm:$0xff]
    %v100 = vld [vmem:[#allocation7 + $0x30] sm:$0xff]
    %v101 = vld [vmem:[#allocation7 + $0x38] sm:$0xff]
    %v102 = vld [vmem:[#allocation7 + $0x40] sm:$0xff]
    %v103 = vld [vmem:[#allocation7 + $0x48] sm:$0xff]
    %v104 = vld [vmem:[#allocation7 + $0x50] sm:$0xff]
    %v105 = vld [vmem:[#allocation7 + $0x58] sm:$0xff]
    %v106 = vld [vmem:[#allocation7 + $0x60] sm:$0xff]
    %v107 = vld [vmem:[#allocation7 + $0x68] sm:$0xff]
    %v108 = vld [vmem:[#allocation7 + $0x70] sm:$0xff]
    %v109 = vld [vmem:[#allocation7 + $0x78] sm:$0xff]
    %v110 = vld [vmem:[#allocation7 + $0x80] sm:$0xff]
    %v111 = vld [vmem:[#allocation7 + $0x88] sm:$0xff]
    %v112 = vld [vmem:[#allocation7 + $0x90] sm:$0xff]
    %v113 = vld [vmem:[#allocation7 + $0x98] sm:$0xff]
    %v114 = vld [vmem:[#allocation7 + $0xa0] sm:$0xff]
    %v115 = vld [vmem:[#allocation7 + $0xa8] sm:$0xff]
    %v116 = vld [vmem:[#allocation7 + $0xb0] sm:$0xff]
    %v117 = vld [vmem:[#allocation7 + $0xb8] sm:$0xff]
    %v118 = vld [vmem:[#allocation7 + $0xc0] sm:$0xff]
    %v119 = vld [vmem:[#allocation7 + $0xc8] sm:$0xff]
    %v120 = vld [vmem:[#allocation7 + $0xd0] sm:$0xff]
    %v121 = vld [vmem:[#allocation7 + $0xd8] sm:$0xff]
    %v122 = vld [vmem:[#allocation7 + $0xe0] sm:$0xff]
    %v123 = vld [vmem:[#allocation7 + $0xe8] sm:$0xff]
    %v124 = vld [vmem:[#allocation7 + $0xf0] sm:$0xff]
    %v125 = vld [vmem:[#allocation7 + $0xf8] sm:$0xff]
    %v126 = vld [vmem:[%s4] sm:$0x3]
    %v128 = vlaneseq
    %v129 = vshrl.u32 %v128, 7
    %v130 = vsub.s32 0, %v129
    %v131 = vrot.slane %v126, %v130
    %v132 = vlaneseq
    %v133 = vshrl.u32 %v132, 7
    %v134 = vsub.s32 1, %v133
    %v135 = vrot.slane %v126, %v134
    %138 = vmatprep.subr.mxu0 %v95
    %139 = vmatpush1.msra.mxu0 %v94
    %140 = vmatprep.subr.mxu0 %v97
    %141 = vmatpush1.msra.mxu0 %v96
    %142 = vmatprep.subr.mxu0 %v99
    %143 = vmatpush1.msra.mxu0 %v98
    %144 = vmatprep.subr.mxu0 %v101
    %145 = vmatpush1.msra.mxu0 %v100
    %146 = vmatprep.subr.mxu0 %v103
    %147 = vmatpush1.msra.mxu0 %v102
    %148 = vmatprep.subr.mxu0 %v105
    %149 = vmatpush1.msra.mxu0 %v104
    %150 = vmatprep.subr.mxu0 %v107
    %151 = vmatpush1.msra.mxu0 %v106
    %152 = vmatprep.subr.mxu0 %v109
    %153 = vmatpush1.msra.mxu0 %v108
    %154 = vmatprep.subr.mxu0 %v111
    %155 = vmatpush1.msra.mxu0 %v110
    %156 = vmatprep.subr.mxu0 %v113
    %157 = vmatpush1.msra.mxu0 %v112
    %158 = vmatprep.subr.mxu0 %v115
    %159 = vmatpush1.msra.mxu0 %v114
    %160 = vmatprep.subr.mxu0 %v117
    %161 = vmatpush1.msra.mxu0 %v116
    %162 = vmatprep.subr.mxu0 %v119
    %163 = vmatpush1.msra.mxu0 %v118
    %164 = vmatprep.subr.mxu0 %v121
    %165 = vmatpush1.msra.mxu0 %v120
    %166 = vmatprep.subr.mxu0 %v123
    %167 = vmatpush1.msra.mxu0 %v122
    %168 = vmatprep.subr.mxu0 %v125
    %169 = vmatpush1.msra.mxu0 %v124
    %170 = vmatprep.subr.mxu0 0.0
    %171 = vmatpush1.msra.mxu0 0.0
    %172 = vmatprep.subr.mxu0 0.0
    %173 = vmatpush1.msra.mxu0 0.0
    %174 = vmatprep.subr.mxu0 0.0
    %175 = vmatpush1.msra.mxu0 0.0
    %176 = vmatprep.subr.mxu0 0.0
    %177 = vmatpush1.msra.mxu0 0.0
    %178 = vmatprep.subr.mxu0 0.0
    %179 = vmatpush1.msra.mxu0 0.0
    %180 = vmatprep.subr.mxu0 0.0
    %181 = vmatpush1.msra.mxu0 0.0
    %182 = vmatprep.subr.mxu0 0.0
    %183 = vmatpush1.msra.mxu0 0.0
    %184 = vmatprep.subr.mxu0 0.0
    %185 = vmatpush1.msra.mxu0 0.0
    %186 = vmatprep.subr.mxu0 0.0
    %187 = vmatpush1.msra.mxu0 0.0
    %188 = vmatprep.subr.mxu0 0.0
    %189 = vmatpush1.msra.mxu0 0.0
    %190 = vmatprep.subr.mxu0 0.0
    %191 = vmatpush1.msra.mxu0 0.0
    %192 = vmatprep.subr.mxu0 0.0
    %193 = vmatpush1.msra.mxu0 0.0
    %194 = vmatprep.subr.mxu0 0.0
    %195 = vmatpush1.msra.mxu0 0.0
    %196 = vmatprep.subr.mxu0 0.0
    %197 = vmatpush1.msra.mxu0 0.0
    %198 = vmatprep.subr.mxu0 0.0
    %199 = vmatpush1.msra.mxu0 0.0
    %200 = vmatprep.subr.mxu0 0.0
    %201 = vmatpush1.msra.mxu0 0.0
    %202 = vmatprep.mubr.f32.mxu0 0.0
    %203 = vmatmul.mubr.f32.gmra.mrb[0].mxu0 %v62
    %v204 = vpop.f32.mrb[0].mxu0
    %v205 = vadd.f32 %v131, %v204
    %v206 = vpop.f32.mrb[0].mxu0
    %v207 = vadd.f32 %v135, %v206
    %208 = vmatprep.mubr.f32.mxu0 0.0
    %209 = vmatmul.mubr.f32.gmra.mrb[0].mxu0 %v63
    %v210 = vpop.f32.mrb[0].mxu0
    %v211 = vadd.f32 %v131, %v210
    %v212 = vpop.f32.mrb[0].mxu0
    %v213 = vadd.f32 %v135, %v212
    %214 = vmatprep.mubr.f32.mxu0 0.0
    %215 = vmatmul.mubr.f32.gmra.mrb[0].mxu0 %v64
    %v216 = vpop.f32.mrb[0].mxu0
    %v217 = vadd.f32 %v131, %v216
    %v218 = vpop.f32.mrb[0].mxu0
    %v219 = vadd.f32 %v135, %v218
    %220 = vmatprep.mubr.f32.mxu0 0.0
    %221 = vmatmul.mubr.f32.gmra.mrb[0].mxu0 %v65
    %v222 = vpop.f32.mrb[0].mxu0
    %v223 = vadd.f32 %v131, %v222
    %v224 = vpop.f32.mrb[0].mxu0
    %v225 = vadd.f32 %v135, %v224
    %226 = vmatprep.mubr.f32.mxu0 0.0
    %227 = vmatmul.mubr.f32.gmra.mrb[0].mxu0 %v66
    %v228 = vpop.f32.mrb[0].mxu0
    %v229 = vadd.f32 %v131, %v228
    %v230 = vpop.f32.mrb[0].mxu0
    %v231 = vadd.f32 %v135, %v230
    %232 = vmatprep.mubr.f32.mxu0 0.0
    %233 = vmatmul.mubr.f32.gmra.mrb[0].mxu0 %v67
    %v234 = vpop.f32.mrb[0].mxu0
    %v235 = vadd.f32 %v131, %v234
    %v236 = vpop.f32.mrb[0].mxu0
    %v237 = vadd.f32 %v135, %v236
    %238 = vmatprep.mubr.f32.mxu0 0.0
    %239 = vmatmul.mubr.f32.gmra.mrb[0].mxu0 %v68
    %v240 = vpop.f32.mrb[0].mxu0
    %v241 = vadd.f32 %v131, %v240
    %v242 = vpop.f32.mrb[0].mxu0
    %v243 = vadd.f32 %v135, %v242
    %244 = vmatprep.mubr.f32.mxu0 0.0
    %245 = vmatmul.mubr.f32.gmra.mrb[0].mxu0 %v69
    %v246 = vpop.f32.mrb[0].mxu0
    %v247 = vadd.f32 %v131, %v246
    %v248 = vpop.f32.mrb[0].mxu0
    %v249 = vadd.f32 %v135, %v248
    %250 = vmatprep.mubr.f32.mxu0 0.0
    %251 = vmatmul.mubr.f32.gmra.mrb[0].mxu0 %v70
    %v252 = vpop.f32.mrb[0].mxu0
    %v253 = vadd.f32 %v131, %v252
    %v254 = vpop.f32.mrb[0].mxu0
    %v255 = vadd.f32 %v135, %v254
    %256 = vmatprep.mubr.f32.mxu0 0.0
    %257 = vmatmul.mubr.f32.gmra.mrb[0].mxu0 %v71
    %v258 = vpop.f32.mrb[0].mxu0
    %v259 = vadd.f32 %v131, %v258
    %v260 = vpop.f32.mrb[0].mxu0
    %v261 = vadd.f32 %v135, %v260
    %262 = vmatprep.mubr.f32.mxu0 0.0
    %263 = vmatmul.mubr.f32.gmra.mrb[0].mxu0 %v72
    %v264 = vpop.f32.mrb[0].mxu0
    %v265 = vadd.f32 %v131, %v264
    %v266 = vpop.f32.mrb[0].mxu0
    %v267 = vadd.f32 %v135, %v266
    %268 = vmatprep.mubr.f32.mxu0 0.0
    %269 = vmatmul.mubr.f32.gmra.mrb[0].mxu0 %v73
    %v270 = vpop.f32.mrb[0].mxu0
    %v271 = vadd.f32 %v131, %v270
    %v272 = vpop.f32.mrb[0].mxu0
    %v273 = vadd.f32 %v135, %v272
    %274 = vmatprep.mubr.f32.mxu0 0.0
    %275 = vmatmul.mubr.f32.gmra.mrb[0].mxu0 %v74
    %v276 = vpop.f32.mrb[0].mxu0
    %v277 = vadd.f32 %v131, %v276
    %v278 = vpop.f32.mrb[0].mxu0
    %v279 = vadd.f32 %v135, %v278
    %280 = vmatprep.mubr.f32.mxu0 0.0
    %281 = vmatmul.mubr.f32.gmra.mrb[0].mxu0 %v75
    %v282 = vpop.f32.mrb[0].mxu0
    %v283 = vadd.f32 %v131, %v282
    %v284 = vpop.f32.mrb[0].mxu0
    %v285 = vadd.f32 %v135, %v284
    %286 = vmatprep.mubr.f32.mxu0 0.0
    %287 = vmatmul.mubr.f32.gmra.mrb[0].mxu0 %v76
    %v288 = vpop.f32.mrb[0].mxu0
    %v289 = vadd.f32 %v131, %v288
    %v290 = vpop.f32.mrb[0].mxu0
    %v291 = vadd.f32 %v135, %v290
    %292 = vmatprep.mubr.f32.mxu0 0.0
    %293 = vmatmul.mubr.f32.gmra.mrb[0].mxu0 %v77
    %v294 = vpop.f32.mrb[0].mxu0
    %v295 = vadd.f32 %v131, %v294
    %v296 = vpop.f32.mrb[0].mxu0
    %v297 = vadd.f32 %v135, %v296
    %298 = vmatprep.mubr.f32.mxu0 0.0
    %299 = vmatmul.mubr.f32.gmra.mrb[0].mxu0 %v78
    %v300 = vpop.f32.mrb[0].mxu0
    %v301 = vadd.f32 %v131, %v300
    %v302 = vpop.f32.mrb[0].mxu0
    %v303 = vadd.f32 %v135, %v302
    %304 = vmatprep.mubr.f32.mxu0 0.0
    %305 = vmatmul.mubr.f32.gmra.mrb[0].mxu0 %v79
    %v306 = vpop.f32.mrb[0].mxu0
    %v307 = vadd.f32 %v131, %v306
    %v308 = vpop.f32.mrb[0].mxu0
    %v309 = vadd.f32 %v135, %v308
    %310 = vmatprep.mubr.f32.mxu0 0.0
    %311 = vmatmul.mubr.f32.gmra.mrb[0].mxu0 %v80
    %v312 = vpop.f32.mrb[0].mxu0
    %v313 = vadd.f32 %v131, %v312
    %v314 = vpop.f32.mrb[0].mxu0
    %v315 = vadd.f32 %v135, %v314
    %316 = vmatprep.mubr.f32.mxu0 0.0
    %317 = vmatmul.mubr.f32.gmra.mrb[0].mxu0 %v81
    %v318 = vpop.f32.mrb[0].mxu0
    %v319 = vadd.f32 %v131, %v318
    %v320 = vpop.f32.mrb[0].mxu0
    %v321 = vadd.f32 %v135, %v320
    %322 = vmatprep.mubr.f32.mxu0 0.0
    %323 = vmatmul.mubr.f32.gmra.mrb[0].mxu0 %v82
    %v324 = vpop.f32.mrb[0].mxu0
    %v325 = vadd.f32 %v131, %v324
    %v326 = vpop.f32.mrb[0].mxu0
    %v327 = vadd.f32 %v135, %v326
    %328 = vmatprep.mubr.f32.mxu0 0.0
    %329 = vmatmul.mubr.f32.gmra.mrb[0].mxu0 %v83
    %v330 = vpop.f32.mrb[0].mxu0
    %v331 = vadd.f32 %v131, %v330
    %v332 = vpop.f32.mrb[0].mxu0
    %v333 = vadd.f32 %v135, %v332
    %334 = vmatprep.mubr.f32.mxu0 0.0
    %335 = vmatmul.mubr.f32.gmra.mrb[0].mxu0 %v84
    %v336 = vpop.f32.mrb[0].mxu0
    %v337 = vadd.f32 %v131, %v336
    %v338 = vpop.f32.mrb[0].mxu0
    %v339 = vadd.f32 %v135, %v338
    %340 = vmatprep.mubr.f32.mxu0 0.0
    %341 = vmatmul.mubr.f32.gmra.mrb[0].mxu0 %v85
    %v342 = vpop.f32.mrb[0].mxu0
    %v343 = vadd.f32 %v131, %v342
    %v344 = vpop.f32.mrb[0].mxu0
    %v345 = vadd.f32 %v135, %v344
    %346 = vmatprep.mubr.f32.mxu0 0.0
    %347 = vmatmul.mubr.f32.gmra.mrb[0].mxu0 %v86
    %v348 = vpop.f32.mrb[0].mxu0
    %v349 = vadd.f32 %v131, %v348
    %v350 = vpop.f32.mrb[0].mxu0
    %v351 = vadd.f32 %v135, %v350
    %352 = vmatprep.mubr.f32.mxu0 0.0
    %353 = vmatmul.mubr.f32.gmra.mrb[0].mxu0 %v87
    %v354 = vpop.f32.mrb[0].mxu0
    %v355 = vadd.f32 %v131, %v354
    %v356 = vpop.f32.mrb[0].mxu0
    %v357 = vadd.f32 %v135, %v356
    %358 = vmatprep.mubr.f32.mxu0 0.0
    %359 = vmatmul.mubr.f32.gmra.mrb[0].mxu0 %v88
    %v360 = vpop.f32.mrb[0].mxu0
    %v361 = vadd.f32 %v131, %v360
    %v362 = vpop.f32.mrb[0].mxu0
    %v363 = vadd.f32 %v135, %v362
    %364 = vmatprep.mubr.f32.mxu0 0.0
    %365 = vmatmul.mubr.f32.gmra.mrb[0].mxu0 %v89
    %v366 = vpop.f32.mrb[0].mxu0
    %v367 = vadd.f32 %v131, %v366
    %v368 = vpop.f32.mrb[0].mxu0
    %v369 = vadd.f32 %v135, %v368
    %370 = vmatprep.mubr.f32.mxu0 0.0
    %371 = vmatmul.mubr.f32.gmra.mrb[0].mxu0 %v90
    %v372 = vpop.f32.mrb[0].mxu0
    %v373 = vadd.f32 %v131, %v372
    %v374 = vpop.f32.mrb[0].mxu0
    %v375 = vadd.f32 %v135, %v374
    %376 = vmatprep.mubr.f32.mxu0 0.0
    %377 = vmatmul.mubr.f32.gmra.mrb[0].mxu0 %v91
    %v378 = vpop.f32.mrb[0].mxu0
    %v379 = vadd.f32 %v131, %v378
    %v380 = vpop.f32.mrb[0].mxu0
    %v381 = vadd.f32 %v135, %v380
    %382 = vmatprep.mubr.f32.mxu0 0.0
    %383 = vmatmul.mubr.f32.gmra.mrb[0].mxu0 %v92
    %v384 = vpop.f32.mrb[0].mxu0
    %v385 = vadd.f32 %v131, %v384
    %v386 = vpop.f32.mrb[0].mxu0
    %v387 = vadd.f32 %v135, %v386
    %388 = vmatprep.mubr.f32.mxu0 0.0
    %389 = vmatmul.mubr.f32.gmra.mrb[0].mxu0 %v93
    %v390 = vpop.f32.mrb[0].mxu0
    %v391 = vadd.f32 %v131, %v390
    %v392 = vpop.f32.mrb[0].mxu0
    %v393 = vadd.f32 %v135, %v392
    %394 = vdwg.mxu0
    %v395 = vmul.f32 %v205, 0.5
    %v396 = vmul.f32 %v207, 0.5
    %v397 = vmul.f32 %v211, 0.5
    %v398 = vmul.f32 %v213, 0.5
    %v399 = vmul.f32 %v217, 0.5
    %v400 = vmul.f32 %v219, 0.5
    %v401 = vmul.f32 %v223, 0.5
    %v402 = vmul.f32 %v225, 0.5
    %v403 = vmul.f32 %v229, 0.5
    %v404 = vmul.f32 %v231, 0.5
    %v405 = vmul.f32 %v235, 0.5
    %v406 = vmul.f32 %v237, 0.5
    %v407 = vmul.f32 %v241, 0.5
    %v408 = vmul.f32 %v243, 0.5
    %v409 = vmul.f32 %v247, 0.5
    %v410 = vmul.f32 %v249, 0.5
    %v411 = vmul.f32 %v253, 0.5
    %v412 = vmul.f32 %v255, 0.5
    %v413 = vmul.f32 %v259, 0.5
    %v414 = vmul.f32 %v261, 0.5
    %v415 = vmul.f32 %v265, 0.5
    %v416 = vmul.f32 %v267, 0.5
    %v417 = vmul.f32 %v271, 0.5
    %v418 = vmul.f32 %v273, 0.5
    %v419 = vmul.f32 %v277, 0.5
    %v420 = vmul.f32 %v279, 0.5
    %v421 = vmul.f32 %v283, 0.5
    %v422 = vmul.f32 %v285, 0.5
    %v423 = vmul.f32 %v289, 0.5
    %v424 = vmul.f32 %v291, 0.5
    %v425 = vmul.f32 %v295, 0.5
    %v426 = vmul.f32 %v297, 0.5
    %v427 = vmul.f32 %v301, 0.5
    %v428 = vmul.f32 %v303, 0.5
    %v429 = vmul.f32 %v307, 0.5
    %v430 = vmul.f32 %v309, 0.5
    %v431 = vmul.f32 %v313, 0.5
    %v432 = vmul.f32 %v315, 0.5
    %v433 = vmul.f32 %v319, 0.5
    %v434 = vmul.f32 %v321, 0.5
    %v435 = vmul.f32 %v325, 0.5
    %v436 = vmul.f32 %v327, 0.5
    %v437 = vmul.f32 %v331, 0.5
    %v438 = vmul.f32 %v333, 0.5
    %v439 = vmul.f32 %v337, 0.5
    %v440 = vmul.f32 %v339, 0.5
    %v441 = vmul.f32 %v343, 0.5
    %v442 = vmul.f32 %v345, 0.5
    %v443 = vmul.f32 %v349, 0.5
    %v444 = vmul.f32 %v351, 0.5
    %v445 = vmul.f32 %v355, 0.5
    %v446 = vmul.f32 %v357, 0.5
    %v447 = vmul.f32 %v361, 0.5
    %v448 = vmul.f32 %v363, 0.5
    %v449 = vmul.f32 %v367, 0.5
    %v450 = vmul.f32 %v369, 0.5
    %v451 = vmul.f32 %v373, 0.5
    %v452 = vmul.f32 %v375, 0.5
    %v453 = vmul.f32 %v379, 0.5
    %v454 = vmul.f32 %v381, 0.5
    %v455 = vmul.f32 %v385, 0.5
    %v456 = vmul.f32 %v387, 0.5
    %v457 = vmul.f32 %v391, 0.5
    %v458 = vmul.f32 %v393, 0.5
    %v459 = vmul.f32 %v205, 0.70710677
    %v460 = vmul.f32 %v207, 0.70710677
    %v461 = vmul.f32 %v211, 0.70710677
    %v462 = vmul.f32 %v213, 0.70710677
    %v463 = vmul.f32 %v217, 0.70710677
    %v464 = vmul.f32 %v219, 0.70710677
    %v465 = vmul.f32 %v223, 0.70710677
    %v466 = vmul.f32 %v225, 0.70710677
    %v467 = vmul.f32 %v229, 0.70710677
    %v468 = vmul.f32 %v231, 0.70710677
    %v469 = vmul.f32 %v235, 0.70710677
    %v470 = vmul.f32 %v237, 0.70710677
    %v471 = vmul.f32 %v241, 0.70710677
    %v472 = vmul.f32 %v243, 0.70710677
    %v473 = vmul.f32 %v247, 0.70710677
    %v474 = vmul.f32 %v249, 0.70710677
    %v475 = vmul.f32 %v253, 0.70710677
    %v476 = vmul.f32 %v255, 0.70710677
    %v477 = vmul.f32 %v259, 0.70710677
    %v478 = vmul.f32 %v261, 0.70710677
    %v479 = vmul.f32 %v265, 0.70710677
    %v480 = vmul.f32 %v267, 0.70710677
    %v481 = vmul.f32 %v271, 0.70710677
    %v482 = vmul.f32 %v273, 0.70710677
    %v483 = vmul.f32 %v277, 0.70710677
    %v484 = vmul.f32 %v279, 0.70710677
    %v485 = vmul.f32 %v283, 0.70710677
    %v486 = vmul.f32 %v285, 0.70710677
    %v487 = vmul.f32 %v289, 0.70710677
    %v488 = vmul.f32 %v291, 0.70710677
    %v489 = vmul.f32 %v295, 0.70710677
    %v490 = vmul.f32 %v297, 0.70710677
    %v491 = vmul.f32 %v301, 0.70710677
    %v492 = vmul.f32 %v303, 0.70710677
    %v493 = vmul.f32 %v307, 0.70710677
    %v494 = vmul.f32 %v309, 0.70710677
    %v495 = vmul.f32 %v313, 0.70710677
    %v496 = vmul.f32 %v315, 0.70710677
    %v497 = vmul.f32 %v319, 0.70710677
    %v498 = vmul.f32 %v321, 0.70710677
    %v499 = vmul.f32 %v325, 0.70710677
    %v500 = vmul.f32 %v327, 0.70710677
    %v501 = vmul.f32 %v331, 0.70710677
    %v502 = vmul.f32 %v333, 0.70710677
    %v503 = vmul.f32 %v337, 0.70710677
    %v504 = vmul.f32 %v339, 0.70710677
    %v505 = vmul.f32 %v343, 0.70710677
    %v506 = vmul.f32 %v345, 0.70710677
    %v507 = vmul.f32 %v349, 0.70710677
    %v508 = vmul.f32 %v351, 0.70710677
    %v509 = vmul.f32 %v355, 0.70710677
    %v510 = vmul.f32 %v357, 0.70710677
    %v511 = vmul.f32 %v361, 0.70710677
    %v512 = vmul.f32 %v363, 0.70710677
    %v513 = vmul.f32 %v367, 0.70710677
    %v514 = vmul.f32 %v369, 0.70710677
    %v515 = vmul.f32 %v373, 0.70710677
    %v516 = vmul.f32 %v375, 0.70710677
    %v517 = vmul.f32 %v379, 0.70710677
    %v518 = vmul.f32 %v381, 0.70710677
    %v519 = vmul.f32 %v385, 0.70710677
    %v520 = vmul.f32 %v387, 0.70710677
    %v521 = vmul.f32 %v391, 0.70710677
    %v522 = vmul.f32 %v393, 0.70710677
    %v523 = verf.f32.pop %v459
    %v524 = verf.f32.pop %v460
    %v525 = verf.f32.pop %v461
    %v526 = verf.f32.pop %v462
    %v527 = verf.f32.pop %v463
    %v528 = verf.f32.pop %v464
    %v529 = verf.f32.pop %v465
    %v530 = verf.f32.pop %v466
    %v531 = verf.f32.pop %v467
    %v532 = verf.f32.pop %v468
    %v533 = verf.f32.pop %v469
    %v534 = verf.f32.pop %v470
    %v535 = verf.f32.pop %v471
    %v536 = verf.f32.pop %v472
    %v537 = verf.f32.pop %v473
    %v538 = verf.f32.pop %v474
    %v539 = verf.f32.pop %v475
    %v540 = verf.f32.pop %v476
    %v541 = verf.f32.pop %v477
    %v542 = verf.f32.pop %v478
    %v543 = verf.f32.pop %v479
    %v544 = verf.f32.pop %v480
    %v545 = verf.f32.pop %v481
    %v546 = verf.f32.pop %v482
    %v547 = verf.f32.pop %v483
    %v548 = verf.f32.pop %v484
    %v549 = verf.f32.pop %v485
    %v550 = verf.f32.pop %v486
    %v551 = verf.f32.pop %v487
    %v552 = verf.f32.pop %v488
    %v553 = verf.f32.pop %v489
    %v554 = verf.f32.pop %v490
    %v555 = verf.f32.pop %v491
    %v556 = verf.f32.pop %v492
    %v557 = verf.f32.pop %v493
    %v558 = verf.f32.pop %v494
    %v559 = verf.f32.pop %v495
    %v560 = verf.f32.pop %v496
    %v561 = verf.f32.pop %v497
    %v562 = verf.f32.pop %v498
    %v563 = verf.f32.pop %v499
    %v564 = verf.f32.pop %v500
    %v565 = verf.f32.pop %v501
    %v566 = verf.f32.pop %v502
    %v567 = verf.f32.pop %v503
    %v568 = verf.f32.pop %v504
    %v569 = verf.f32.pop %v505
    %v570 = verf.f32.pop %v506
    %v571 = verf.f32.pop %v507
    %v572 = verf.f32.pop %v508
    %v573 = verf.f32.pop %v509
    %v574 = verf.f32.pop %v510
    %v575 = verf.f32.pop %v511
    %v576 = verf.f32.pop %v512
    %v577 = verf.f32.pop %v513
    %v578 = verf.f32.pop %v514
    %v579 = verf.f32.pop %v515
    %v580 = verf.f32.pop %v516
    %v581 = verf.f32.pop %v517
    %v582 = verf.f32.pop %v518
    %v583 = verf.f32.pop %v519
    %v584 = verf.f32.pop %v520
    %v585 = verf.f32.pop %v521
    %v586 = verf.f32.pop %v522
    %v587 = vadd.f32 %v523, 1.0
    %v588 = vadd.f32 %v524, 1.0
    %v589 = vadd.f32 %v525, 1.0
    %v590 = vadd.f32 %v526, 1.0
    %v591 = vadd.f32 %v527, 1.0
    %v592 = vadd.f32 %v528, 1.0
    %v593 = vadd.f32 %v529, 1.0
    %v594 = vadd.f32 %v530, 1.0
    %v595 = vadd.f32 %v531, 1.0
    %v596 = vadd.f32 %v532, 1.0
    %v597 = vadd.f32 %v533, 1.0
    %v598 = vadd.f32 %v534, 1.0
    %v599 = vadd.f32 %v535, 1.0
    %v600 = vadd.f32 %v536, 1.0
    %v601 = vadd.f32 %v537, 1.0
    %v602 = vadd.f32 %v538, 1.0
    %v603 = vadd.f32 %v539, 1.0
    %v604 = vadd.f32 %v540, 1.0
    %v605 = vadd.f32 %v541, 1.0
    %v606 = vadd.f32 %v542, 1.0
    %v607 = vadd.f32 %v543, 1.0
    %v608 = vadd.f32 %v544, 1.0
    %v609 = vadd.f32 %v545, 1.0
    %v610 = vadd.f32 %v546, 1.0
    %v611 = vadd.f32 %v547, 1.0
    %v612 = vadd.f32 %v548, 1.0
    %v613 = vadd.f32 %v549, 1.0
    %v614 = vadd.f32 %v550, 1.0
    %v615 = vadd.f32 %v551, 1.0
    %v616 = vadd.f32 %v552, 1.0
    %v617 = vadd.f32 %v553, 1.0
    %v618 = vadd.f32 %v554, 1.0
    %v619 = vadd.f32 %v555, 1.0
    %v620 = vadd.f32 %v556, 1.0
    %v621 = vadd.f32 %v557, 1.0
    %v622 = vadd.f32 %v558, 1.0
    %v623 = vadd.f32 %v559, 1.0
    %v624 = vadd.f32 %v560, 1.0
    %v625 = vadd.f32 %v561, 1.0
    %v626 = vadd.f32 %v562, 1.0
    %v627 = vadd.f32 %v563, 1.0
    %v628 = vadd.f32 %v564, 1.0
    %v629 = vadd.f32 %v565, 1.0
    %v630 = vadd.f32 %v566, 1.0
    %v631 = vadd.f32 %v567, 1.0
    %v632 = vadd.f32 %v568, 1.0
    %v633 = vadd.f32 %v569, 1.0
    %v634 = vadd.f32 %v570, 1.0
    %v635 = vadd.f32 %v571, 1.0
    %v636 = vadd.f32 %v572, 1.0
    %v637 = vadd.f32 %v573, 1.0
    %v638 = vadd.f32 %v574, 1.0
    %v639 = vadd.f32 %v575, 1.0
    %v640 = vadd.f32 %v576, 1.0
    %v641 = vadd.f32 %v577, 1.0
    %v642 = vadd.f32 %v578, 1.0
    %v643 = vadd.f32 %v579, 1.0
    %v644 = vadd.f32 %v580, 1.0
    %v645 = vadd.f32 %v581, 1.0
    %v646 = vadd.f32 %v582, 1.0
    %v647 = vadd.f32 %v583, 1.0
    %v648 = vadd.f32 %v584, 1.0
    %v649 = vadd.f32 %v585, 1.0
    %v650 = vadd.f32 %v586, 1.0
    %v651 = vmul.f32 %v395, %v587
    %v652 = vmul.f32 %v396, %v588
    %v653 = vmul.f32 %v397, %v589
    %v654 = vmul.f32 %v398, %v590
    %v655 = vmul.f32 %v399, %v591
    %v656 = vmul.f32 %v400, %v592
    %v657 = vmul.f32 %v401, %v593
    %v658 = vmul.f32 %v402, %v594
    %v659 = vmul.f32 %v403, %v595
    %v660 = vmul.f32 %v404, %v596
    %v661 = vmul.f32 %v405, %v597
    %v662 = vmul.f32 %v406, %v598
    %v663 = vmul.f32 %v407, %v599
    %v664 = vmul.f32 %v408, %v600
    %v665 = vmul.f32 %v409, %v601
    %v666 = vmul.f32 %v410, %v602
    %v667 = vmul.f32 %v411, %v603
    %v668 = vmul.f32 %v412, %v604
    %v669 = vmul.f32 %v413, %v605
    %v670 = vmul.f32 %v414, %v606
    %v671 = vmul.f32 %v415, %v607
    %v672 = vmul.f32 %v416, %v608
    %v673 = vmul.f32 %v417, %v609
    %v674 = vmul.f32 %v418, %v610
    %v675 = vmul.f32 %v419, %v611
    %v676 = vmul.f32 %v420, %v612
    %v677 = vmul.f32 %v421, %v613
    %v678 = vmul.f32 %v422, %v614
    %v679 = vmul.f32 %v423, %v615
    %v680 = vmul.f32 %v424, %v616
    %v681 = vmul.f32 %v425, %v617
    %v682 = vmul.f32 %v426, %v618
    %v683 = vmul.f32 %v427, %v619
    %v684 = vmul.f32 %v428, %v620
    %v685 = vmul.f32 %v429, %v621
    %v686 = vmul.f32 %v430, %v622
    %v687 = vmul.f32 %v431, %v623
    %v688 = vmul.f32 %v432, %v624
    %v689 = vmul.f32 %v433, %v625
    %v690 = vmul.f32 %v434, %v626
    %v691 = vmul.f32 %v435, %v627
    %v692 = vmul.f32 %v436, %v628
    %v693 = vmul.f32 %v437, %v629
    %v694 = vmul.f32 %v438, %v630
    %v695 = vmul.f32 %v439, %v631
    %v696 = vmul.f32 %v440, %v632
    %v697 = vmul.f32 %v441, %v633
    %v698 = vmul.f32 %v442, %v634
    %v699 = vmul.f32 %v443, %v635
    %v700 = vmul.f32 %v444, %v636
    %v701 = vmul.f32 %v445, %v637
    %v702 = vmul.f32 %v446, %v638
    %v703 = vmul.f32 %v447, %v639
    %v704 = vmul.f32 %v448, %v640
    %v705 = vmul.f32 %v449, %v641
    %v706 = vmul.f32 %v450, %v642
    %v707 = vmul.f32 %v451, %v643
    %v708 = vmul.f32 %v452, %v644
    %v709 = vmul.f32 %v453, %v645
    %v710 = vmul.f32 %v454, %v646
    %v711 = vmul.f32 %v455, %v647
    %v712 = vmul.f32 %v456, %v648
    %v713 = vmul.f32 %v457, %v649
    %v714 = vmul.f32 %v458, %v650
    %v715 = vld [vmem:[#allocation5] sm:$0xff]
    %v716 = vld [vmem:[#allocation5 + $0x8] sm:$0xff]
    %v717 = vld [vmem:[#allocation5 + $0x10] sm:$0xff]
    %v718 = vld [vmem:[#allocation5 + $0x18] sm:$0xff]
    %v719 = vld [vmem:[#allocation5 + $0x20] sm:$0xff]
    %v720 = vld [vmem:[#allocation5 + $0x28] sm:$0xff]
    %v721 = vld [vmem:[#allocation5 + $0x30] sm:$0xff]
    %v722 = vld [vmem:[#allocation5 + $0x38] sm:$0xff]
    %v723 = vld [vmem:[#allocation5 + $0x40] sm:$0xff]
    %v724 = vld [vmem:[#allocation5 + $0x48] sm:$0xff]
    %v725 = vld [vmem:[#allocation5 + $0x50] sm:$0xff]
    %v726 = vld [vmem:[#allocation5 + $0x58] sm:$0xff]
    %v727 = vld [vmem:[#allocation5 + $0x60] sm:$0xff]
    %v728 = vld [vmem:[#allocation5 + $0x68] sm:$0xff]
    %v729 = vld [vmem:[#allocation5 + $0x70] sm:$0xff]
    %v730 = vld [vmem:[#allocation5 + $0x78] sm:$0xff]
    %v731 = vld [vmem:[#allocation5 + $0x80] sm:$0xff]
    %v732 = vld [vmem:[#allocation5 + $0x88] sm:$0xff]
    %v733 = vld [vmem:[#allocation5 + $0x90] sm:$0xff]
    %v734 = vld [vmem:[#allocation5 + $0x98] sm:$0xff]
    %v735 = vld [vmem:[#allocation5 + $0xa0] sm:$0xff]
    %v736 = vld [vmem:[#allocation5 + $0xa8] sm:$0xff]
    %v737 = vld [vmem:[#allocation5 + $0xb0] sm:$0xff]
    %v738 = vld [vmem:[#allocation5 + $0xb8] sm:$0xff]
    %v739 = vld [vmem:[#allocation5 + $0xc0] sm:$0xff]
    %v740 = vld [vmem:[#allocation5 + $0xc8] sm:$0xff]
    %v741 = vld [vmem:[#allocation5 + $0xd0] sm:$0xff]
    %v742 = vld [vmem:[#allocation5 + $0xd8] sm:$0xff]
    %v743 = vld [vmem:[#allocation5 + $0xe0] sm:$0xff]
    %v744 = vld [vmem:[#allocation5 + $0xe8] sm:$0xff]
    %v745 = vld [vmem:[#allocation5 + $0xf0] sm:$0xff]
    %v746 = vld [vmem:[#allocation5 + $0xf8] sm:$0xff]
    %v747 = vld [vmem:[%s3] sm:$0x3]
    %v749 = vlaneseq
    %v750 = vshrl.u32 %v749, 7
    %v751 = vsub.s32 0, %v750
    %v752 = vrot.slane %v747, %v751
    %v753 = vlaneseq
    %v754 = vshrl.u32 %v753, 7
    %v755 = vsub.s32 1, %v754
    %v756 = vrot.slane %v747, %v755
    %759 = vmatprep.subr.mxu0 %v716
    %760 = vmatpush1.msra.mxu0 %v715
    %761 = vmatprep.subr.mxu0 %v718
    %762 = vmatpush1.msra.mxu0 %v717
    %763 = vmatprep.subr.mxu0 %v720
    %764 = vmatpush1.msra.mxu0 %v719
    %765 = vmatprep.subr.mxu0 %v722
    %766 = vmatpush1.msra.mxu0 %v721
    %767 = vmatprep.subr.mxu0 %v724
    %768 = vmatpush1.msra.mxu0 %v723
    %769 = vmatprep.subr.mxu0 %v726
    %770 = vmatpush1.msra.mxu0 %v725
    %771 = vmatprep.subr.mxu0 %v728
    %772 = vmatpush1.msra.mxu0 %v727
    %773 = vmatprep.subr.mxu0 %v730
    %774 = vmatpush1.msra.mxu0 %v729
    %775 = vmatprep.subr.mxu0 %v732
    %776 = vmatpush1.msra.mxu0 %v731
    %777 = vmatprep.subr.mxu0 %v734
    %778 = vmatpush1.msra.mxu0 %v733
    %779 = vmatprep.subr.mxu0 %v736
    %780 = vmatpush1.msra.mxu0 %v735
    %781 = vmatprep.subr.mxu0 %v738
    %782 = vmatpush1.msra.mxu0 %v737
    %783 = vmatprep.subr.mxu0 %v740
    %784 = vmatpush1.msra.mxu0 %v739
    %785 = vmatprep.subr.mxu0 %v742
    %786 = vmatpush1.msra.mxu0 %v741
    %787 = vmatprep.subr.mxu0 %v744
    %788 = vmatpush1.msra.mxu0 %v743
    %789 = vmatprep.subr.mxu0 %v746
    %790 = vmatpush1.msra.mxu0 %v745
    %791 = vmatprep.subr.mxu0 0.0
    %792 = vmatpush1.msra.mxu0 0.0
    %793 = vmatprep.subr.mxu0 0.0
    %794 = vmatpush1.msra.mxu0 0.0
    %795 = vmatprep.subr.mxu0 0.0
    %796 = vmatpush1.msra.mxu0 0.0
    %797 = vmatprep.subr.mxu0 0.0
    %798 = vmatpush1.msra.mxu0 0.0
    %799 = vmatprep.subr.mxu0 0.0
    %800 = vmatpush1.msra.mxu0 0.0
    %801 = vmatprep.subr.mxu0 0.0
    %802 = vmatpush1.msra.mxu0 0.0
    %803 = vmatprep.subr.mxu0 0.0
    %804 = vmatpush1.msra.mxu0 0.0
    %805 = vmatprep.subr.mxu0 0.0
    %806 = vmatpush1.msra.mxu0 0.0
    %807 = vmatprep.subr.mxu0 0.0
    %808 = vmatpush1.msra.mxu0 0.0
    %809 = vmatprep.subr.mxu0 0.0
    %810 = vmatpush1.msra.mxu0 0.0
    %811 = vmatprep.subr.mxu0 0.0
    %812 = vmatpush1.msra.mxu0 0.0
    %813 = vmatprep.subr.mxu0 0.0
    %814 = vmatpush1.msra.mxu0 0.0
    %815 = vmatprep.subr.mxu0 0.0
    %816 = vmatpush1.msra.mxu0 0.0
    %817 = vmatprep.subr.mxu0 0.0
    %818 = vmatpush1.msra.mxu0 0.0
    %819 = vmatprep.subr.mxu0 0.0
    %820 = vmatpush1.msra.mxu0 0.0
    %821 = vmatprep.subr.mxu0 0.0
    %822 = vmatpush1.msra.mxu0 0.0
    %823 = vmatprep.mubr.f32.mxu0 0.0
    %824 = vmatmul.mubr.f32.gmra.mrb[0].mxu0 %v62
    %v825 = vpop.f32.mrb[0].mxu0
    %v826 = vadd.f32 %v752, %v825
    %v827 = vpop.f32.mrb[0].mxu0
    %v828 = vadd.f32 %v756, %v827
    %829 = vmatprep.mubr.f32.mxu0 0.0
    %830 = vmatmul.mubr.f32.gmra.mrb[0].mxu0 %v63
    %v831 = vpop.f32.mrb[0].mxu0
    %v832 = vadd.f32 %v752, %v831
    %v833 = vpop.f32.mrb[0].mxu0
    %v834 = vadd.f32 %v756, %v833
    %835 = vmatprep.mubr.f32.mxu0 0.0
    %836 = vmatmul.mubr.f32.gmra.mrb[0].mxu0 %v64
    %v837 = vpop.f32.mrb[0].mxu0
    %v838 = vadd.f32 %v752, %v837
    %v839 = vpop.f32.mrb[0].mxu0
    %v840 = vadd.f32 %v756, %v839
    %841 = vmatprep.mubr.f32.mxu0 0.0
    %842 = vmatmul.mubr.f32.gmra.mrb[0].mxu0 %v65
    %v843 = vpop.f32.mrb[0].mxu0
    %v844 = vadd.f32 %v752, %v843
    %v845 = vpop.f32.mrb[0].mxu0
    %v846 = vadd.f32 %v756, %v845
    %847 = vmatprep.mubr.f32.mxu0 0.0
    %848 = vmatmul.mubr.f32.gmra.mrb[0].mxu0 %v66
    %v849 = vpop.f32.mrb[0].mxu0
    %v850 = vadd.f32 %v752, %v849
    %v851 = vpop.f32.mrb[0].mxu0
    %v852 = vadd.f32 %v756, %v851
    %853 = vmatprep.mubr.f32.mxu0 0.0
    %854 = vmatmul.mubr.f32.gmra.mrb[0].mxu0 %v67
    %v855 = vpop.f32.mrb[0].mxu0
    %v856 = vadd.f32 %v752, %v855
    %v857 = vpop.f32.mrb[0].mxu0
    %v858 = vadd.f32 %v756, %v857
    %859 = vmatprep.mubr.f32.mxu0 0.0
    %860 = vmatmul.mubr.f32.gmra.mrb[0].mxu0 %v68
    %v861 = vpop.f32.mrb[0].mxu0
    %v862 = vadd.f32 %v752, %v861
    %v863 = vpop.f32.mrb[0].mxu0
    %v864 = vadd.f32 %v756, %v863
    %865 = vmatprep.mubr.f32.mxu0 0.0
    %866 = vmatmul.mubr.f32.gmra.mrb[0].mxu0 %v69
    %v867 = vpop.f32.mrb[0].mxu0
    %v868 = vadd.f32 %v752, %v867
    %v869 = vpop.f32.mrb[0].mxu0
    %v870 = vadd.f32 %v756, %v869
    %871 = vmatprep.mubr.f32.mxu0 0.0
    %872 = vmatmul.mubr.f32.gmra.mrb[0].mxu0 %v70
    %v873 = vpop.f32.mrb[0].mxu0
    %v874 = vadd.f32 %v752, %v873
    %v875 = vpop.f32.mrb[0].mxu0
    %v876 = vadd.f32 %v756, %v875
    %877 = vmatprep.mubr.f32.mxu0 0.0
    %878 = vmatmul.mubr.f32.gmra.mrb[0].mxu0 %v71
    %v879 = vpop.f32.mrb[0].mxu0
    %v880 = vadd.f32 %v752, %v879
    %v881 = vpop.f32.mrb[0].mxu0
    %v882 = vadd.f32 %v756, %v881
    %883 = vmatprep.mubr.f32.mxu0 0.0
    %884 = vmatmul.mubr.f32.gmra.mrb[0].mxu0 %v72
    %v885 = vpop.f32.mrb[0].mxu0
    %v886 = vadd.f32 %v752, %v885
    %v887 = vpop.f32.mrb[0].mxu0
    %v888 = vadd.f32 %v756, %v887
    %889 = vmatprep.mubr.f32.mxu0 0.0
    %890 = vmatmul.mubr.f32.gmra.mrb[0].mxu0 %v73
    %v891 = vpop.f32.mrb[0].mxu0
    %v892 = vadd.f32 %v752, %v891
    %v893 = vpop.f32.mrb[0].mxu0
    %v894 = vadd.f32 %v756, %v893
    %895 = vmatprep.mubr.f32.mxu0 0.0
    %896 = vmatmul.mubr.f32.gmra.mrb[0].mxu0 %v74
    %v897 = vpop.f32.mrb[0].mxu0
    %v898 = vadd.f32 %v752, %v897
    %v899 = vpop.f32.mrb[0].mxu0
    %v900 = vadd.f32 %v756, %v899
    %901 = vmatprep.mubr.f32.mxu0 0.0
    %902 = vmatmul.mubr.f32.gmra.mrb[0].mxu0 %v75
    %v903 = vpop.f32.mrb[0].mxu0
    %v904 = vadd.f32 %v752, %v903
    %v905 = vpop.f32.mrb[0].mxu0
    %v906 = vadd.f32 %v756, %v905
    %907 = vmatprep.mubr.f32.mxu0 0.0
    %908 = vmatmul.mubr.f32.gmra.mrb[0].mxu0 %v76
    %v909 = vpop.f32.mrb[0].mxu0
    %v910 = vadd.f32 %v752, %v909
    %v911 = vpop.f32.mrb[0].mxu0
    %v912 = vadd.f32 %v756, %v911
    %913 = vmatprep.mubr.f32.mxu0 0.0
    %914 = vmatmul.mubr.f32.gmra.mrb[0].mxu0 %v77
    %v915 = vpop.f32.mrb[0].mxu0
    %v916 = vadd.f32 %v752, %v915
    %v917 = vpop.f32.mrb[0].mxu0
    %v918 = vadd.f32 %v756, %v917
    %919 = vmatprep.mubr.f32.mxu0 0.0
    %920 = vmatmul.mubr.f32.gmra.mrb[0].mxu0 %v78
    %v921 = vpop.f32.mrb[0].mxu0
    %v922 = vadd.f32 %v752, %v921
    %v923 = vpop.f32.mrb[0].mxu0
    %v924 = vadd.f32 %v756, %v923
    %925 = vmatprep.mubr.f32.mxu0 0.0
    %926 = vmatmul.mubr.f32.gmra.mrb[0].mxu0 %v79
    %v927 = vpop.f32.mrb[0].mxu0
    %v928 = vadd.f32 %v752, %v927
    %v929 = vpop.f32.mrb[0].mxu0
    %v930 = vadd.f32 %v756, %v929
    %931 = vmatprep.mubr.f32.mxu0 0.0
    %932 = vmatmul.mubr.f32.gmra.mrb[0].mxu0 %v80
    %v933 = vpop.f32.mrb[0].mxu0
    %v934 = vadd.f32 %v752, %v933
    %v935 = vpop.f32.mrb[0].mxu0
    %v936 = vadd.f32 %v756, %v935
    %937 = vmatprep.mubr.f32.mxu0 0.0
    %938 = vmatmul.mubr.f32.gmra.mrb[0].mxu0 %v81
    %v939 = vpop.f32.mrb[0].mxu0
    %v940 = vadd.f32 %v752, %v939
    %v941 = vpop.f32.mrb[0].mxu0
    %v942 = vadd.f32 %v756, %v941
    %943 = vmatprep.mubr.f32.mxu0 0.0
    %944 = vmatmul.mubr.f32.gmra.mrb[0].mxu0 %v82
    %v945 = vpop.f32.mrb[0].mxu0
    %v946 = vadd.f32 %v752, %v945
    %v947 = vpop.f32.mrb[0].mxu0
    %v948 = vadd.f32 %v756, %v947
    %949 = vmatprep.mubr.f32.mxu0 0.0
    %950 = vmatmul.mubr.f32.gmra.mrb[0].mxu0 %v83
    %v951 = vpop.f32.mrb[0].mxu0
    %v952 = vadd.f32 %v752, %v951
    %v953 = vpop.f32.mrb[0].mxu0
    %v954 = vadd.f32 %v756, %v953
    %955 = vmatprep.mubr.f32.mxu0 0.0
    %956 = vmatmul.mubr.f32.gmra.mrb[0].mxu0 %v84
    %v957 = vpop.f32.mrb[0].mxu0
    %v958 = vadd.f32 %v752, %v957
    %v959 = vpop.f32.mrb[0].mxu0
    %v960 = vadd.f32 %v756, %v959
    %961 = vmatprep.mubr.f32.mxu0 0.0
    %962 = vmatmul.mubr.f32.gmra.mrb[0].mxu0 %v85
    %v963 = vpop.f32.mrb[0].mxu0
    %v964 = vadd.f32 %v752, %v963
    %v965 = vpop.f32.mrb[0].mxu0
    %v966 = vadd.f32 %v756, %v965
    %967 = vmatprep.mubr.f32.mxu0 0.0
    %968 = vmatmul.mubr.f32.gmra.mrb[0].mxu0 %v86
    %v969 = vpop.f32.mrb[0].mxu0
    %v970 = vadd.f32 %v752, %v969
    %v971 = vpop.f32.mrb[0].mxu0
    %v972 = vadd.f32 %v756, %v971
    %973 = vmatprep.mubr.f32.mxu0 0.0
    %974 = vmatmul.mubr.f32.gmra.mrb[0].mxu0 %v87
    %v975 = vpop.f32.mrb[0].mxu0
    %v976 = vadd.f32 %v752, %v975
    %v977 = vpop.f32.mrb[0].mxu0
    %v978 = vadd.f32 %v756, %v977
    %979 = vmatprep.mubr.f32.mxu0 0.0
    %980 = vmatmul.mubr.f32.gmra.mrb[0].mxu0 %v88
    %v981 = vpop.f32.mrb[0].mxu0
    %v982 = vadd.f32 %v752, %v981
    %v983 = vpop.f32.mrb[0].mxu0
    %v984 = vadd.f32 %v756, %v983
    %985 = vmatprep.mubr.f32.mxu0 0.0
    %986 = vmatmul.mubr.f32.gmra.mrb[0].mxu0 %v89
    %v987 = vpop.f32.mrb[0].mxu0
    %v988 = vadd.f32 %v752, %v987
    %v989 = vpop.f32.mrb[0].mxu0
    %v990 = vadd.f32 %v756, %v989
    %991 = vmatprep.mubr.f32.mxu0 0.0
    %992 = vmatmul.mubr.f32.gmra.mrb[0].mxu0 %v90
    %v993 = vpop.f32.mrb[0].mxu0
    %v994 = vadd.f32 %v752, %v993
    %v995 = vpop.f32.mrb[0].mxu0
    %v996 = vadd.f32 %v756, %v995
    %997 = vmatprep.mubr.f32.mxu0 0.0
    %998 = vmatmul.mubr.f32.gmra.mrb[0].mxu0 %v91
    %v999 = vpop.f32.mrb[0].mxu0
    %v1000 = vadd.f32 %v752, %v999
    %v1001 = vpop.f32.mrb[0].mxu0
    %v1002 = vadd.f32 %v756, %v1001
    %1003 = vmatprep.mubr.f32.mxu0 0.0
    %1004 = vmatmul.mubr.f32.gmra.mrb[0].mxu0 %v92
    %v1005 = vpop.f32.mrb[0].mxu0
    %v1006 = vadd.f32 %v752, %v1005
    %v1007 = vpop.f32.mrb[0].mxu0
    %v1008 = vadd.f32 %v756, %v1007
    %1009 = vmatprep.mubr.f32.mxu0 0.0
    %1010 = vmatmul.mubr.f32.gmra.mrb[0].mxu0 %v93
    %v1011 = vpop.f32.mrb[0].mxu0
    %v1012 = vadd.f32 %v752, %v1011
    %v1013 = vpop.f32.mrb[0].mxu0
    %v1014 = vadd.f32 %v756, %v1013
    %1015 = vdwg.mxu0
    %v1016 = vmul.f32 %v826, %v651
    %v1017 = vmul.f32 %v828, %v652
    %v1018 = vmul.f32 %v832, %v653
    %v1019 = vmul.f32 %v834, %v654
    %v1020 = vmul.f32 %v838, %v655
    %v1021 = vmul.f32 %v840, %v656
    %v1022 = vmul.f32 %v844, %v657
    %v1023 = vmul.f32 %v846, %v658
    %v1024 = vmul.f32 %v850, %v659
    %v1025 = vmul.f32 %v852, %v660
    %v1026 = vmul.f32 %v856, %v661
    %v1027 = vmul.f32 %v858, %v662
    %v1028 = vmul.f32 %v862, %v663
    %v1029 = vmul.f32 %v864, %v664
    %v1030 = vmul.f32 %v868, %v665
    %v1031 = vmul.f32 %v870, %v666
    %v1032 = vmul.f32 %v874, %v667
    %v1033 = vmul.f32 %v876, %v668
    %v1034 = vmul.f32 %v880, %v669
    %v1035 = vmul.f32 %v882, %v670
    %v1036 = vmul.f32 %v886, %v671
    %v1037 = vmul.f32 %v888, %v672
    %v1038 = vmul.f32 %v892, %v673
    %v1039 = vmul.f32 %v894, %v674
    %v1040 = vmul.f32 %v898, %v675
    %v1041 = vmul.f32 %v900, %v676
    %v1042 = vmul.f32 %v904, %v677
    %v1043 = vmul.f32 %v906, %v678
    %v1044 = vmul.f32 %v910, %v679
    %v1045 = vmul.f32 %v912, %v680
    %v1046 = vmul.f32 %v916, %v681
    %v1047 = vmul.f32 %v918, %v682
    %v1048 = vmul.f32 %v922, %v683
    %v1049 = vmul.f32 %v924, %v684
    %v1050 = vmul.f32 %v928, %v685
    %v1051 = vmul.f32 %v930, %v686
    %v1052 = vmul.f32 %v934, %v687
    %v1053 = vmul.f32 %v936, %v688
    %v1054 = vmul.f32 %v940, %v689
    %v1055 = vmul.f32 %v942, %v690
    %v1056 = vmul.f32 %v946, %v691
    %v1057 = vmul.f32 %v948, %v692
    %v1058 = vmul.f32 %v952, %v693
    %v1059 = vmul.f32 %v954, %v694
    %v1060 = vmul.f32 %v958, %v695
    %v1061 = vmul.f32 %v960, %v696
    %v1062 = vmul.f32 %v964, %v697
    %v1063 = vmul.f32 %v966, %v698
    %v1064 = vmul.f32 %v970, %v699
    %v1065 = vmul.f32 %v972, %v700
    %v1066 = vmul.f32 %v976, %v701
    %v1067 = vmul.f32 %v978, %v702
    %v1068 = vmul.f32 %v982, %v703
    %v1069 = vmul.f32 %v984, %v704
    %v1070 = vmul.f32 %v988, %v705
    %v1071 = vmul.f32 %v990, %v706
    %v1072 = vmul.f32 %v994, %v707
    %v1073 = vmul.f32 %v996, %v708
    %v1074 = vmul.f32 %v1000, %v709
    %v1075 = vmul.f32 %v1002, %v710
    %v1076 = vmul.f32 %v1006, %v711
    %v1077 = vmul.f32 %v1008, %v712
    %v1078 = vmul.f32 %v1012, %v713
    %v1079 = vmul.f32 %v1014, %v714
    %1080 = vst [vmem:[#allocation8] sm:$0xff] %v1016
    %1081 = vst [vmem:[#allocation8 + $0x8] sm:$0xff] %v1017
    %1082 = vst [vmem:[#allocation8 + $0x10] sm:$0xff] %v1018
    %1083 = vst [vmem:[#allocation8 + $0x18] sm:$0xff] %v1019
    %1084 = vst [vmem:[#allocation8 + $0x20] sm:$0xff] %v1020
    %1085 = vst [vmem:[#allocation8 + $0x28] sm:$0xff] %v1021
    %1086 = vst [vmem:[#allocation8 + $0x30] sm:$0xff] %v1022
    %1087 = vst [vmem:[#allocation8 + $0x38] sm:$0xff] %v1023
    %1088 = vst [vmem:[#allocation8 + $0x40] sm:$0xff] %v1024
    %1089 = vst [vmem:[#allocation8 + $0x48] sm:$0xff] %v1025
    %1090 = vst [vmem:[#allocation8 + $0x50] sm:$0xff] %v1026
    %1091 = vst [vmem:[#allocation8 + $0x58] sm:$0xff] %v1027
    %1092 = vst [vmem:[#allocation8 + $0x60] sm:$0xff] %v1028
    %1093 = vst [vmem:[#allocation8 + $0x68] sm:$0xff] %v1029
    %1094 = vst [vmem:[#allocation8 + $0x70] sm:$0xff] %v1030
    %1095 = vst [vmem:[#allocation8 + $0x78] sm:$0xff] %v1031
    %1096 = vst [vmem:[#allocation8 + $0x80] sm:$0xff] %v1032
    %1097 = vst [vmem:[#allocation8 + $0x88] sm:$0xff] %v1033
    %1098 = vst [vmem:[#allocation8 + $0x90] sm:$0xff] %v1034
    %1099 = vst [vmem:[#allocation8 + $0x98] sm:$0xff] %v1035
    %1100 = vst [vmem:[#allocation8 + $0xa0] sm:$0xff] %v1036
    %1101 = vst [vmem:[#allocation8 + $0xa8] sm:$0xff] %v1037
    %1102 = vst [vmem:[#allocation8 + $0xb0] sm:$0xff] %v1038
    %1103 = vst [vmem:[#allocation8 + $0xb8] sm:$0xff] %v1039
    %1104 = vst [vmem:[#allocation8 + $0xc0] sm:$0xff] %v1040
    %1105 = vst [vmem:[#allocation8 + $0xc8] sm:$0xff] %v1041
    %1106 = vst [vmem:[#allocation8 + $0xd0] sm:$0xff] %v1042
    %1107 = vst [vmem:[#allocation8 + $0xd8] sm:$0xff] %v1043
    %1108 = vst [vmem:[#allocation8 + $0xe0] sm:$0xff] %v1044
    %1109 = vst [vmem:[#allocation8 + $0xe8] sm:$0xff] %v1045
    %1110 = vst [vmem:[#allocation8 + $0xf0] sm:$0xff] %v1046
    %1111 = vst [vmem:[#allocation8 + $0xf8] sm:$0xff] %v1047
    %1112 = vst [vmem:[#allocation8 + $0x100] sm:$0xff] %v1048
    %1113 = vst [vmem:[#allocation8 + $0x108] sm:$0xff] %v1049
    %1114 = vst [vmem:[#allocation8 + $0x110] sm:$0xff] %v1050
    %1115 = vst [vmem:[#allocation8 + $0x118] sm:$0xff] %v1051
    %1116 = vst [vmem:[#allocation8 + $0x120] sm:$0xff] %v1052
    %1117 = vst [vmem:[#allocation8 + $0x128] sm:$0xff] %v1053
    %1118 = vst [vmem:[#allocation8 + $0x130] sm:$0xff] %v1054
    %1119 = vst [vmem:[#allocation8 + $0x138] sm:$0xff] %v1055
    %1120 = vst [vmem:[#allocation8 + $0x140] sm:$0xff] %v1056
    %1121 = vst [vmem:[#allocation8 + $0x148] sm:$0xff] %v1057
    %1122 = vst [vmem:[#allocation8 + $0x150] sm:$0xff] %v1058
    %1123 = vst [vmem:[#allocation8 + $0x158] sm:$0xff] %v1059
    %1124 = vst [vmem:[#allocation8 + $0x160] sm:$0xff] %v1060
    %1125 = vst [vmem:[#allocation8 + $0x168] sm:$0xff] %v1061
    %1126 = vst [vmem:[#allocation8 + $0x170] sm:$0xff] %v1062
    %1127 = vst [vmem:[#allocation8 + $0x178] sm:$0xff] %v1063
    %1128 = vst [vmem:[#allocation8 + $0x180] sm:$0xff] %v1064
    %1129 = vst [vmem:[#allocation8 + $0x188] sm:$0xff] %v1065
    %1130 = vst [vmem:[#allocation8 + $0x190] sm:$0xff] %v1066
    %1131 = vst [vmem:[#allocation8 + $0x198] sm:$0xff] %v1067
    %1132 = vst [vmem:[#allocation8 + $0x1a0] sm:$0xff] %v1068
    %1133 = vst [vmem:[#allocation8 + $0x1a8] sm:$0xff] %v1069
    %1134 = vst [vmem:[#allocation8 + $0x1b0] sm:$0xff] %v1070
    %1135 = vst [vmem:[#allocation8 + $0x1b8] sm:$0xff] %v1071
    %1136 = vst [vmem:[#allocation8 + $0x1c0] sm:$0xff] %v1072
    %1137 = vst [vmem:[#allocation8 + $0x1c8] sm:$0xff] %v1073
    %1138 = vst [vmem:[#allocation8 + $0x1d0] sm:$0xff] %v1074
    %1139 = vst [vmem:[#allocation8 + $0x1d8] sm:$0xff] %v1075
    %1140 = vst [vmem:[#allocation8 + $0x1e0] sm:$0xff] %v1076
    %1141 = vst [vmem:[#allocation8 + $0x1e8] sm:$0xff] %v1077
    %1142 = vst [vmem:[#allocation8 + $0x1f0] sm:$0xff] %v1078
    %1143 = vst [vmem:[#allocation8 + $0x1f8] sm:$0xff] %v1079
    // Predicated region
    $region34: #{tpu_custom_call.1} parent=1 // pred_check
      _
    $region35: #{tpu_custom_call.1} parent=1 // pred_check_branch
      %1145 = sbr.rel (0) target = $region37
    $region36: #{tpu_custom_call.1} parent=1 // pred_region
      %s1147 = ssub.s32 8192, 8192
      %1148 = vsyncadd [#allocation4], %s1147
      %s1149 = sshll.u32 [#allocation8], 4
      %s1150 = int_to_ptr.vmem [resolvable:$true] %s1149
      %1155 = dma.vmem_to_hbm [thread:$0]  %s1150, 8192, %s5, [#allocation4], 256, 256, 16
    $region37: #{tpu_custom_call.1} parent=1 // pred_fallthru
      _
    // Predicated region
    $region38: #{tpu_custom_call.1} parent=1 // pred_check
      _
    $region39: #{tpu_custom_call.1} parent=1 // pred_check_branch
      %1157 = sbr.rel (0) target = $region41
    $region40: #{tpu_custom_call.1} parent=1 // pred_region
      %1158 = dma.done [#allocation4], 8192
    $region41: #{tpu_custom_call.1} parent=1 // pred_fallthru
      _
    %1159 = vsyncpa [#allocation3], 1
    %1160 = vsyncpa [#allocation6], 1
    %1161 = vsyncpa [#allocation4], 1

</llo_original>
